<compile_context>
chip_gen: v5e
topology: v5e:2x2
jax: 0.10.0
libtpu: 0.0.40
codegen_flags: <defaults>
</compile_context>

<pallas_src>
import functools

import jax
import jax.numpy as jnp
from jax.experimental import pallas as pl
from jax.experimental.pallas import tpu as pltpu


# ---------------------------------------------------------------------------
# Fused kernel: 2-layer LSTM wavefront + final FC, single pallas_call.
# ---------------------------------------------------------------------------
def _wavefront_lstm_fc_kernel(x_ref, wx_ref, bias_ref, wcomb_ref,
                              fcw_ref, fcb_ref,
                              y_ref, out_ref, gx_ref, *, T, B, I, H):
    """Refs (all whole-array, VMEM resident):

    x_ref:      (T, B, I)    time-major input
    wx_ref:     (I, 8H)      bf16, layer-1 W_ih^T in interleaved gate columns
                             (layer-2 columns are zero)
    bias_ref:   (1, 8H)      f32, interleaved combined biases [b1 | b2] per gate
    wcomb_ref:  (2H, 8H)     bf16 block-recurrent matrix (see module docstring)
    fcw_ref:    (H, Cpad)    bf16, FC weight^T, class dim padded to 128 lanes
    fcb_ref:    (1, Cpad)    f32
    y_ref:      (T, B, H)    output: top-layer hidden states
    out_ref:    (B, Cpad)    output: padded logits
    gx_ref:     (T, B, 8H)   f32 VMEM scratch for the hoisted input projection
    """
    H2 = 2 * H          # stacked state width  [h1 | h2]
    G8 = 8 * H          # interleaved gate width [i1,i2,f1,f2,g1,g2,o1,o2]

    bias = bias_ref[...]                                        # (1, 8H) f32

    # Hoisted input projection for ALL timesteps (one MXU matmul, outside the
    # serial chain).  Layer-2 columns of wx are zero, so those columns of the
    # result are exactly layer-2's bias -- which is what the wavefront needs.
    x2 = x_ref[...].reshape(T * B, I).astype(jnp.bfloat16)
    gx_ref[...] = (
        jnp.dot(x2, wx_ref[...], preferred_element_type=jnp.float32) + bias
    ).reshape(T, B, G8)

    wcomb = wcomb_ref[...]                                      # (2H, 8H) bf16

    # Lane mask selecting the layer-1 half of the stacked state (hoisted).
    lane = jax.lax.broadcasted_iota(jnp.int32, (B, H2), 1)
    keep_l1 = lane < H

    h_st = jnp.zeros((B, H2), jnp.float32)    # [h1_{s-1} | h2_{s-2}]
    c_st = jnp.zeros((B, H2), jnp.float32)
    h_top_last = None

    # Wavefront recurrence: step s computes layer 1 @ time s together with
    # layer 2 @ time s-1 using ONE block-recurrent matmul.
    for s in range(T + 1):
        add = gx_ref[s] if s < T else bias                      # (B,8H)/(1,8H)
        g = add + jnp.dot(h_st.astype(jnp.bfloat16), wcomb,
                          preferred_element_type=jnp.float32)   # (B, 8H)

        # Two full-width transcendentals instead of eight fragment-width ones.
        sg = jax.nn.sigmoid(g)
        th = jnp.tanh(g)
        i_g = sg[:, 0 * H2:1 * H2]            # [i1 | i2]  (64-lane aligned)
        f_g = sg[:, 1 * H2:2 * H2]            # [f1 | f2]
        g_g = th[:, 2 * H2:3 * H2]            # [g1 | g2]
        o_g = sg[:, 3 * H2:4 * H2]            # [o1 | o2]

        c_new = f_g * c_st + i_g * g_g        # stacked cell update, both layers
        h_new = o_g * jnp.tanh(c_new)

        if s == 0:
            # Layer-2 half of step 0 corresponds to (invalid) time -1:
            # keep its zero initial state.
            c_st = jnp.where(keep_l1, c_new, 0.0)
            h_st = jnp.where(keep_l1, h_new, 0.0)
        elif s < T:
            c_st = c_new
            h_st = h_new
        # s == T: nothing left to carry.

        if s >= 1:
            h_top = h_new[:, H:H2]            # layer-2 hidden at time s-1
            y_ref[s - 1] = h_top.astype(y_ref.dtype)   # static-index VMEM store
            h_top_last = h_top

    # Fused final FC on the last timestep of the top layer (lane-dense Cpad).
    out_ref[...] = (
        jnp.dot(h_top_last.astype(jnp.bfloat16), fcw_ref[...],
                preferred_element_type=jnp.float32)
        + fcb_ref[...]
    ).astype(out_ref.dtype)


# ---------------------------------------------------------------------------
# One-time weight prep (transpose, gate/layer interleave, bf16 cast, padding)
# ---------------------------------------------------------------------------
def prepare_params(params):
    lstm = params["lstm"]
    # The fused wavefront kernel is specialized to the 2-layer configuration
    # used by the RNNRepair MNIST model.
    assert len(lstm) == 2, "fused wavefront kernel expects num_layers == 2"
    l1, l2 = lstm
    H = l1["w_hh"].shape[1]
    I = l1["w_ih"].shape[1]

    w_ih1_t = jnp.transpose(l1["w_ih"])          # (I, 4H), gate order i,f,g,o
    w_hh1_t = jnp.transpose(l1["w_hh"])          # (H, 4H)
    w_ih2_t = jnp.transpose(l2["w_ih"])          # (H, 4H)
    w_hh2_t = jnp.transpose(l2["w_hh"])          # (H, 4H)
    b1 = (l1["b_ih"] + l1["b_hh"]).reshape(1, -1)
    b2 = (l2["b_ih"] + l2["b_hh"]).reshape(1, -1)

    def interleave(a, b):
        # (R, 4H) x (R, 4H) -> (R, 8H), columns ordered i1,i2,f1,f2,g1,g2,o1,o2
        blocks = []
        for g in range(4):
            blocks.append(a[:, g * H:(g + 1) * H])
            blocks.append(b[:, g * H:(g + 1) * H])
        return jnp.concatenate(blocks, axis=1)

    # x projection only feeds layer 1; layer-2 columns are zero so the hoisted
    # projection's layer-2 columns equal b2 after the bias add.
    w_x = interleave(w_ih1_t, jnp.zeros((I, 4 * H), jnp.float32))     # (I, 8H)
    bias = interleave(b1, b2)                                          # (1, 8H)
    # Block-recurrent matrix: rows 0:H multiply h1, rows H:2H multiply h2.
    w_comb = jnp.concatenate(
        [interleave(w_hh1_t, w_ih2_t),
         interleave(jnp.zeros((H, 4 * H), jnp.float32), w_hh2_t)],
        axis=0)                                                        # (2H, 8H)

    # FC: transpose and pad the class dim to a lane-dense multiple of 128.
    C = params["fc_w"].shape[0]
    Cpad = max(128, ((C + 127) // 128) * 128)
    fc_w_t = jnp.pad(jnp.transpose(params["fc_w"]), ((0, 0), (0, Cpad - C)))
    fc_b = jnp.pad(params["fc_b"], (0, Cpad - C)).reshape(1, -1)

    return {
        "w_x": w_x.astype(jnp.bfloat16),
        "bias": bias.astype(jnp.float32),
        "w_comb": w_comb.astype(jnp.bfloat16),
        "fc_w_t": fc_w_t.astype(jnp.bfloat16),
        "fc_b": fc_b.astype(jnp.float32),
    }


# ---------------------------------------------------------------------------
# Forward wrapper (mirror of RNN.forward with zero initial h0/c0)
# ---------------------------------------------------------------------------
@functools.partial(jax.jit, static_argnames=("num_classes",))
def rnn_forward(x, prepared, *, num_classes):
    """x: (B, T, input_size) f32 (batch_first).  Returns (state_vec, out)."""
    B, T, I = x.shape
    H = prepared["w_comb"].shape[0] // 2
    Cpad = prepared["fc_w_t"].shape[1]

    x_tbi = jnp.transpose(x, (1, 0, 2))          # time-major (T, B, I)

    kernel = functools.partial(_wavefront_lstm_fc_kernel, T=T, B=B, I=I, H=H)
    vmem = pl.BlockSpec(memory_space=pltpu.MemorySpace.VMEM)

    # TODO(synk): for large B on v7x, add a batch grid with
    # dimension_semantics=("parallel",) to use the second TensorCore; at B=2
    # a grid-less single call is the right shape.
    y_tbh, out_pad = pl.pallas_call(
        kernel,
        out_shape=(
            jax.ShapeDtypeStruct((T, B, H), x.dtype),
            jax.ShapeDtypeStruct((B, Cpad), jnp.float32),
        ),
        in_specs=[vmem] * 6,
        out_specs=(vmem, vmem),
        scratch_shapes=[pltpu.VMEM((T, B, 8 * H), jnp.float32)],
        compiler_params=pltpu.CompilerParams(
            vmem_limit_bytes=32 * 1024 * 1024),
    )(x_tbi, prepared["w_x"], prepared["bias"], prepared["w_comb"],
      prepared["fc_w_t"], prepared["fc_b"])

    state_vec = jnp.transpose(y_tbh, (1, 0, 2))  # (B, T, H)
    out = out_pad[:, :num_classes]
    return state_vec, out


# ---------------------------------------------------------------------------
# Deterministic parameter init (PyTorch-style uniform(-1/sqrt(H), 1/sqrt(H)))
# ---------------------------------------------------------------------------
def init_params(key, input_size, hidden_size, num_layers, num_classes):
    k = 1.0 / jnp.sqrt(jnp.float32(hidden_size))
    layers = []
    for l in range(num_layers):
        in_dim = input_size if l == 0 else hidden_size
        key, k1, k2, k3, k4 = jax.random.split(key, 5)
        layers.append({
            "w_ih": jax.random.uniform(k1, (4 * hidden_size, in_dim), jnp.float32, -k, k),
            "w_hh": jax.random.uniform(k2, (4 * hidden_size, hidden_size), jnp.float32, -k, k),
            "b_ih": jax.random.uniform(k3, (4 * hidden_size,), jnp.float32, -k, k),
            "b_hh": jax.random.uniform(k4, (4 * hidden_size,), jnp.float32, -k, k),
        })
    key, k5, k6 = jax.random.split(key, 3)
    fc_w = jax.random.uniform(k5, (num_classes, hidden_size), jnp.float32, -k, k)
    fc_b = jax.random.uniform(k6, (num_classes,), jnp.float32, -k, k)
    return {"lstm": layers, "fc_w": fc_w, "fc_b": fc_b}


# ---------------------------------------------------------------------------
# Pure-JAX f32 reference (correctness check)
# ---------------------------------------------------------------------------
def reference_forward(x, params):
    B, T, _ = x.shape
    h_seq = x
    for layer in params["lstm"]:
        H = layer["w_hh"].shape[1]
        w_ih_t = layer["w_ih"].T
        w_hh_t = layer["w_hh"].T
        b = layer["b_ih"] + layer["b_hh"]

        def step(carry, xt):
            h, c = carry
            gates = xt @ w_ih_t + h @ w_hh_t + b
            i = jax.nn.sigmoid(gates[:, 0 * H:1 * H])
            f = jax.nn.sigmoid(gates[:, 1 * H:2 * H])
            g = jnp.tanh(gates[:, 2 * H:3 * H])
            o = jax.nn.sigmoid(gates[:, 3 * H:4 * H])
            c = f * c + i * g
            h = o * jnp.tanh(c)
            return (h, c), h

        h0 = jnp.zeros((B, H), jnp.float32)
        c0 = jnp.zeros((B, H), jnp.float32)
        _, ys = jax.lax.scan(step, (h0, c0), jnp.transpose(h_seq, (1, 0, 2)))
        h_seq = jnp.transpose(ys, (1, 0, 2))
    out = h_seq[:, -1, :] @ params["fc_w"].T + params["fc_b"]
    return h_seq, out


# ---------------------------------------------------------------------------
if __name__ == "__main__":
    B, T = 2, 8                 # batch, sequence length
    INPUT_SIZE = 16
    HIDDEN_SIZE = 32
    NUM_LAYERS = 2
    NUM_CLASSES = 10

    key = jax.random.PRNGKey(0)
    key, kx, kp = jax.random.split(key, 3)
    x = jax.random.normal(kx, (B, T, INPUT_SIZE), jnp.float32)
    params = init_params(kp, INPUT_SIZE, HIDDEN_SIZE, NUM_LAYERS, NUM_CLASSES)
    prepared = prepare_params(params)   # one-time transpose/interleave/pad/bf16

    state_vec, out = rnn_forward(x, prepared, num_classes=NUM_CLASSES)
    state_vec = jax.block_until_ready(state_vec)
    out = jax.block_until_ready(out)

    # Sanity check vs f32 pure-JAX reference.  Tolerance is loosened because
    # the kernel feeds bf16 operands to the MXU (accumulation stays f32).
    ref_state, ref_out = reference_forward(x, params)
    assert state_vec.shape == (B, T, HIDDEN_SIZE)
    assert out.shape == (B, NUM_CLASSES)
    assert jnp.allclose(state_vec, ref_state, atol=5e-2, rtol=5e-2)
    assert jnp.allclose(out, ref_out, atol=5e-2, rtol=5e-2)

    print("KERNEL_OK")
</pallas_src>

<mosaic_0001>
module attributes {stable_mosaic.version = 11 : i64} {
  func.func @_wavefront_lstm_fc_kernel(%arg0: memref<8x2x16xf32, #tpu.memory_space<vmem>>, %arg1: memref<16x256xbf16, #tpu.memory_space<vmem>>, %arg2: memref<1x256xf32, #tpu.memory_space<vmem>>, %arg3: memref<64x256xbf16, #tpu.memory_space<vmem>>, %arg4: memref<32x128xbf16, #tpu.memory_space<vmem>>, %arg5: memref<1x128xf32, #tpu.memory_space<vmem>>, %arg6: memref<8x2x32xf32, #tpu.memory_space<vmem>>, %arg7: memref<2x128xf32, #tpu.memory_space<vmem>>, %arg8: memref<8x2x256xf32, #tpu.memory_space<vmem>>) attributes {dimension_semantics = [], scalar_prefetch = 0 : i64, scratch_operands = 1 : i64, tpu.core_type = #tpu.core_type<tc>} {
    %c0 = arith.constant 0 : index
    %c0_0 = arith.constant 0 : index
    %0 = vector.load %arg2[%c0, %c0_0] : memref<1x256xf32, #tpu.memory_space<vmem>>, vector<1x256xf32>
    %c0_1 = arith.constant 0 : index
    %c0_2 = arith.constant 0 : index
    %c0_3 = arith.constant 0 : index
    %1 = vector.load %arg0[%c0_1, %c0_2, %c0_3] : memref<8x2x16xf32, #tpu.memory_space<vmem>>, vector<8x2x16xf32>
    %2 = vector.shape_cast %1 : vector<8x2x16xf32> to vector<16x16xf32>
    %3 = arith.truncf %2 : vector<16x16xf32> to vector<16x16xbf16>
    %c0_4 = arith.constant 0 : index
    %c0_5 = arith.constant 0 : index
    %4 = vector.load %arg1[%c0_4, %c0_5] : memref<16x256xbf16, #tpu.memory_space<vmem>>, vector<16x256xbf16>
    %cst = arith.constant dense<0.000000e+00> : vector<16x256xf32>
    %5 = tpu.matmul %3, %4, %cst {dimension_numbers = #tpu.dot_dimension_numbers<[1], [0], [0], [1], [0, 0, 1, 1], [], []>} : vector<16x16xbf16>, vector<16x256xbf16>, vector<16x256xf32> -> vector<16x256xf32>
    %6 = vector.broadcast %0 : vector<1x256xf32> to vector<16x256xf32>
    %7 = arith.addf %5, %6 : vector<16x256xf32>
    %8 = vector.shape_cast %7 : vector<16x256xf32> to vector<8x2x256xf32>
    %c0_6 = arith.constant 0 : index
    %c0_7 = arith.constant 0 : index
    %c0_8 = arith.constant 0 : index
    %9 = vector.load %arg8[%c0_6, %c0_7, %c0_8] : memref<8x2x256xf32, #tpu.memory_space<vmem>>, vector<8x2x256xf32>
    tpu.vector_store %arg8[%c0_6, %c0_7, %c0_8], %8 {strides = array<i32>} : memref<8x2x256xf32, #tpu.memory_space<vmem>>, vector<8x2x256xf32>,
    %c0_9 = arith.constant 0 : index
    %c0_10 = arith.constant 0 : index
    %10 = vector.load %arg3[%c0_9, %c0_10] : memref<64x256xbf16, #tpu.memory_space<vmem>>, vector<64x256xbf16>
    %11 = tpu.iota {dimensions = array<i32: 1>} : vector<2x64xi32>
    %c32_i32 = arith.constant 32 : i32
    %12 = vector.broadcast %c32_i32 : i32 to vector<2x64xi32>
    %13 = arith.cmpi slt, %11, %12 : vector<2x64xi32>
    %cst_11 = arith.constant 0.000000e+00 : f32
    %14 = vector.broadcast %cst_11 : f32 to vector<2x64xf32>
    %cst_12 = arith.constant 0.000000e+00 : f32
    %15 = vector.broadcast %cst_12 : f32 to vector<2x64xf32>
    %c0_13 = arith.constant 0 : index
    %c0_14 = arith.constant 0 : index
    %c0_15 = arith.constant 0 : index
    %16 = vector.load %arg8[%c0_13, %c0_14, %c0_15] : memref<8x2x256xf32, #tpu.memory_space<vmem>>, vector<1x2x256xf32>
    %17 = vector.shape_cast %16 : vector<1x2x256xf32> to vector<2x256xf32>
    %18 = arith.truncf %14 : vector<2x64xf32> to vector<2x64xbf16>
    %cst_16 = arith.constant dense<0.000000e+00> : vector<2x256xf32>
    %19 = tpu.matmul %18, %10, %cst_16 {dimension_numbers = #tpu.dot_dimension_numbers<[1], [0], [0], [1], [0, 0, 1, 1], [], []>} : vector<2x64xbf16>, vector<64x256xbf16>, vector<2x256xf32> -> vector<2x256xf32>
    %20 = arith.addf %17, %19 : vector<2x256xf32>
    %21 = arith.negf %20 : vector<2x256xf32>
    %22 = math.exp %21 : vector<2x256xf32>
    %cst_17 = arith.constant 1.000000e+00 : f32
    %23 = vector.broadcast %cst_17 : f32 to vector<2x256xf32>
    %24 = arith.addf %23, %22 : vector<2x256xf32>
    %25 = arith.divf %23, %24 : vector<2x256xf32>
    %26 = math.tanh %20 : vector<2x256xf32>
    %27 = vector.extract_strided_slice %25 {offsets = [0, 0], sizes = [2, 64], strides = [1, 1]} : vector<2x256xf32> to vector<2x64xf32>
    %28 = vector.extract_strided_slice %25 {offsets = [0, 64], sizes = [2, 64], strides = [1, 1]} : vector<2x256xf32> to vector<2x64xf32>
    %29 = vector.extract_strided_slice %26 {offsets = [0, 128], sizes = [2, 64], strides = [1, 1]} : vector<2x256xf32> to vector<2x64xf32>
    %30 = vector.extract_strided_slice %25 {offsets = [0, 192], sizes = [2, 64], strides = [1, 1]} : vector<2x256xf32> to vector<2x64xf32>
    %31 = arith.mulf %28, %15 : vector<2x64xf32>
    %32 = arith.mulf %27, %29 : vector<2x64xf32>
    %33 = arith.addf %31, %32 : vector<2x64xf32>
    %34 = math.tanh %33 : vector<2x64xf32>
    %35 = arith.mulf %30, %34 : vector<2x64xf32>
    %cst_18 = arith.constant 0.000000e+00 : f32
    %36 = vector.broadcast %cst_18 : f32 to vector<2x64xf32>
    %37 = arith.select %13, %33, %36 : vector<2x64xi1>, vector<2x64xf32>
    %cst_19 = arith.constant 0.000000e+00 : f32
    %38 = vector.broadcast %cst_19 : f32 to vector<2x64xf32>
    %39 = arith.select %13, %35, %38 : vector<2x64xi1>, vector<2x64xf32>
    %c1 = arith.constant 1 : index
    %c0_20 = arith.constant 0 : index
    %c0_21 = arith.constant 0 : index
    %40 = vector.load %arg8[%c1, %c0_20, %c0_21] : memref<8x2x256xf32, #tpu.memory_space<vmem>>, vector<1x2x256xf32>
    %41 = vector.shape_cast %40 : vector<1x2x256xf32> to vector<2x256xf32>
    %42 = arith.truncf %39 : vector<2x64xf32> to vector<2x64xbf16>
    %cst_22 = arith.constant dense<0.000000e+00> : vector<2x256xf32>
    %43 = tpu.matmul %42, %10, %cst_22 {dimension_numbers = #tpu.dot_dimension_numbers<[1], [0], [0], [1], [0, 0, 1, 1], [], []>} : vector<2x64xbf16>, vector<64x256xbf16>, vector<2x256xf32> -> vector<2x256xf32>
    %44 = arith.addf %41, %43 : vector<2x256xf32>
    %45 = arith.negf %44 : vector<2x256xf32>
    %46 = math.exp %45 : vector<2x256xf32>
    %cst_23 = arith.constant 1.000000e+00 : f32
    %47 = vector.broadcast %cst_23 : f32 to vector<2x256xf32>
    %48 = arith.addf %47, %46 : vector<2x256xf32>
    %49 = arith.divf %47, %48 : vector<2x256xf32>
    %50 = math.tanh %44 : vector<2x256xf32>
    %51 = vector.extract_strided_slice %49 {offsets = [0, 0], sizes = [2, 64], strides = [1, 1]} : vector<2x256xf32> to vector<2x64xf32>
    %52 = vector.extract_strided_slice %49 {offsets = [0, 64], sizes = [2, 64], strides = [1, 1]} : vector<2x256xf32> to vector<2x64xf32>
    %53 = vector.extract_strided_slice %50 {offsets = [0, 128], sizes = [2, 64], strides = [1, 1]} : vector<2x256xf32> to vector<2x64xf32>
    %54 = vector.extract_strided_slice %49 {offsets = [0, 192], sizes = [2, 64], strides = [1, 1]} : vector<2x256xf32> to vector<2x64xf32>
    %55 = arith.mulf %52, %37 : vector<2x64xf32>
    %56 = arith.mulf %51, %53 : vector<2x64xf32>
    %57 = arith.addf %55, %56 : vector<2x64xf32>
    %58 = math.tanh %57 : vector<2x64xf32>
    %59 = arith.mulf %54, %58 : vector<2x64xf32>
    %60 = vector.extract_strided_slice %59 {offsets = [0, 32], sizes = [2, 32], strides = [1, 1]} : vector<2x64xf32> to vector<2x32xf32>
    %c0_24 = arith.constant 0 : index
    %c0_25 = arith.constant 0 : index
    %c0_26 = arith.constant 0 : index
    %61 = vector.load %arg6[%c0_24, %c0_25, %c0_26] : memref<8x2x32xf32, #tpu.memory_space<vmem>>, vector<1x2x32xf32>
    %62 = vector.shape_cast %61 : vector<1x2x32xf32> to vector<2x32xf32>
    %63 = vector.shape_cast %60 : vector<2x32xf32> to vector<1x2x32xf32>
    tpu.vector_store %arg6[%c0_24, %c0_25, %c0_26], %63 {strides = array<i32>} : memref<8x2x32xf32, #tpu.memory_space<vmem>>, vector<1x2x32xf32>,
    %c2 = arith.constant 2 : index
    %c0_27 = arith.constant 0 : index
    %c0_28 = arith.constant 0 : index
    %64 = vector.load %arg8[%c2, %c0_27, %c0_28] : memref<8x2x256xf32, #tpu.memory_space<vmem>>, vector<1x2x256xf32>
    %65 = vector.shape_cast %64 : vector<1x2x256xf32> to vector<2x256xf32>
    %66 = arith.truncf %59 : vector<2x64xf32> to vector<2x64xbf16>
    %cst_29 = arith.constant dense<0.000000e+00> : vector<2x256xf32>
    %67 = tpu.matmul %66, %10, %cst_29 {dimension_numbers = #tpu.dot_dimension_numbers<[1], [0], [0], [1], [0, 0, 1, 1], [], []>} : vector<2x64xbf16>, vector<64x256xbf16>, vector<2x256xf32> -> vector<2x256xf32>
    %68 = arith.addf %65, %67 : vector<2x256xf32>
    %69 = arith.negf %68 : vector<2x256xf32>
    %70 = math.exp %69 : vector<2x256xf32>
    %cst_30 = arith.constant 1.000000e+00 : f32
    %71 = vector.broadcast %cst_30 : f32 to vector<2x256xf32>
    %72 = arith.addf %71, %70 : vector<2x256xf32>
    %73 = arith.divf %71, %72 : vector<2x256xf32>
    %74 = math.tanh %68 : vector<2x256xf32>
    %75 = vector.extract_strided_slice %73 {offsets = [0, 0], sizes = [2, 64], strides = [1, 1]} : vector<2x256xf32> to vector<2x64xf32>
    %76 = vector.extract_strided_slice %73 {offsets = [0, 64], sizes = [2, 64], strides = [1, 1]} : vector<2x256xf32> to vector<2x64xf32>
    %77 = vector.extract_strided_slice %74 {offsets = [0, 128], sizes = [2, 64], strides = [1, 1]} : vector<2x256xf32> to vector<2x64xf32>
    %78 = vector.extract_strided_slice %73 {offsets = [0, 192], sizes = [2, 64], strides = [1, 1]} : vector<2x256xf32> to vector<2x64xf32>
    %79 = arith.mulf %76, %57 : vector<2x64xf32>
    %80 = arith.mulf %75, %77 : vector<2x64xf32>
    %81 = arith.addf %79, %80 : vector<2x64xf32>
    %82 = math.tanh %81 : vector<2x64xf32>
    %83 = arith.mulf %78, %82 : vector<2x64xf32>
    %84 = vector.extract_strided_slice %83 {offsets = [0, 32], sizes = [2, 32], strides = [1, 1]} : vector<2x64xf32> to vector<2x32xf32>
    %c1_31 = arith.constant 1 : index
    %c0_32 = arith.constant 0 : index
    %c0_33 = arith.constant 0 : index
    %85 = vector.load %arg6[%c1_31, %c0_32, %c0_33] : memref<8x2x32xf32, #tpu.memory_space<vmem>>, vector<1x2x32xf32>
    %86 = vector.shape_cast %85 : vector<1x2x32xf32> to vector<2x32xf32>
    %87 = vector.shape_cast %84 : vector<2x32xf32> to vector<1x2x32xf32>
    tpu.vector_store %arg6[%c1_31, %c0_32, %c0_33], %87 {strides = array<i32>} : memref<8x2x32xf32, #tpu.memory_space<vmem>>, vector<1x2x32xf32>,
    %c3 = arith.constant 3 : index
    %c0_34 = arith.constant 0 : index
    %c0_35 = arith.constant 0 : index
    %88 = vector.load %arg8[%c3, %c0_34, %c0_35] : memref<8x2x256xf32, #tpu.memory_space<vmem>>, vector<1x2x256xf32>
    %89 = vector.shape_cast %88 : vector<1x2x256xf32> to vector<2x256xf32>
    %90 = arith.truncf %83 : vector<2x64xf32> to vector<2x64xbf16>
    %cst_36 = arith.constant dense<0.000000e+00> : vector<2x256xf32>
    %91 = tpu.matmul %90, %10, %cst_36 {dimension_numbers = #tpu.dot_dimension_numbers<[1], [0], [0], [1], [0, 0, 1, 1], [], []>} : vector<2x64xbf16>, vector<64x256xbf16>, vector<2x256xf32> -> vector<2x256xf32>
    %92 = arith.addf %89, %91 : vector<2x256xf32>
    %93 = arith.negf %92 : vector<2x256xf32>
    %94 = math.exp %93 : vector<2x256xf32>
    %cst_37 = arith.constant 1.000000e+00 : f32
    %95 = vector.broadcast %cst_37 : f32 to vector<2x256xf32>
    %96 = arith.addf %95, %94 : vector<2x256xf32>
    %97 = arith.divf %95, %96 : vector<2x256xf32>
    %98 = math.tanh %92 : vector<2x256xf32>
    %99 = vector.extract_strided_slice %97 {offsets = [0, 0], sizes = [2, 64], strides = [1, 1]} : vector<2x256xf32> to vector<2x64xf32>
    %100 = vector.extract_strided_slice %97 {offsets = [0, 64], sizes = [2, 64], strides = [1, 1]} : vector<2x256xf32> to vector<2x64xf32>
    %101 = vector.extract_strided_slice %98 {offsets = [0, 128], sizes = [2, 64], strides = [1, 1]} : vector<2x256xf32> to vector<2x64xf32>
    %102 = vector.extract_strided_slice %97 {offsets = [0, 192], sizes = [2, 64], strides = [1, 1]} : vector<2x256xf32> to vector<2x64xf32>
    %103 = arith.mulf %100, %81 : vector<2x64xf32>
    %104 = arith.mulf %99, %101 : vector<2x64xf32>
    %105 = arith.addf %103, %104 : vector<2x64xf32>
    %106 = math.tanh %105 : vector<2x64xf32>
    %107 = arith.mulf %102, %106 : vector<2x64xf32>
    %108 = vector.extract_strided_slice %107 {offsets = [0, 32], sizes = [2, 32], strides = [1, 1]} : vector<2x64xf32> to vector<2x32xf32>
    %c2_38 = arith.constant 2 : index
    %c0_39 = arith.constant 0 : index
    %c0_40 = arith.constant 0 : index
    %109 = vector.load %arg6[%c2_38, %c0_39, %c0_40] : memref<8x2x32xf32, #tpu.memory_space<vmem>>, vector<1x2x32xf32>
    %110 = vector.shape_cast %109 : vector<1x2x32xf32> to vector<2x32xf32>
    %111 = vector.shape_cast %108 : vector<2x32xf32> to vector<1x2x32xf32>
    tpu.vector_store %arg6[%c2_38, %c0_39, %c0_40], %111 {strides = array<i32>} : memref<8x2x32xf32, #tpu.memory_space<vmem>>, vector<1x2x32xf32>,
    %c4 = arith.constant 4 : index
    %c0_41 = arith.constant 0 : index
    %c0_42 = arith.constant 0 : index
    %112 = vector.load %arg8[%c4, %c0_41, %c0_42] : memref<8x2x256xf32, #tpu.memory_space<vmem>>, vector<1x2x256xf32>
    %113 = vector.shape_cast %112 : vector<1x2x256xf32> to vector<2x256xf32>
    %114 = arith.truncf %107 : vector<2x64xf32> to vector<2x64xbf16>
    %cst_43 = arith.constant dense<0.000000e+00> : vector<2x256xf32>
    %115 = tpu.matmul %114, %10, %cst_43 {dimension_numbers = #tpu.dot_dimension_numbers<[1], [0], [0], [1], [0, 0, 1, 1], [], []>} : vector<2x64xbf16>, vector<64x256xbf16>, vector<2x256xf32> -> vector<2x256xf32>
    %116 = arith.addf %113, %115 : vector<2x256xf32>
    %117 = arith.negf %116 : vector<2x256xf32>
    %118 = math.exp %117 : vector<2x256xf32>
    %cst_44 = arith.constant 1.000000e+00 : f32
    %119 = vector.broadcast %cst_44 : f32 to vector<2x256xf32>
    %120 = arith.addf %119, %118 : vector<2x256xf32>
    %121 = arith.divf %119, %120 : vector<2x256xf32>
    %122 = math.tanh %116 : vector<2x256xf32>
    %123 = vector.extract_strided_slice %121 {offsets = [0, 0], sizes = [2, 64], strides = [1, 1]} : vector<2x256xf32> to vector<2x64xf32>
    %124 = vector.extract_strided_slice %121 {offsets = [0, 64], sizes = [2, 64], strides = [1, 1]} : vector<2x256xf32> to vector<2x64xf32>
    %125 = vector.extract_strided_slice %122 {offsets = [0, 128], sizes = [2, 64], strides = [1, 1]} : vector<2x256xf32> to vector<2x64xf32>
    %126 = vector.extract_strided_slice %121 {offsets = [0, 192], sizes = [2, 64], strides = [1, 1]} : vector<2x256xf32> to vector<2x64xf32>
    %127 = arith.mulf %124, %105 : vector<2x64xf32>
    %128 = arith.mulf %123, %125 : vector<2x64xf32>
    %129 = arith.addf %127, %128 : vector<2x64xf32>
    %130 = math.tanh %129 : vector<2x64xf32>
    %131 = arith.mulf %126, %130 : vector<2x64xf32>
    %132 = vector.extract_strided_slice %131 {offsets = [0, 32], sizes = [2, 32], strides = [1, 1]} : vector<2x64xf32> to vector<2x32xf32>
    %c3_45 = arith.constant 3 : index
    %c0_46 = arith.constant 0 : index
    %c0_47 = arith.constant 0 : index
    %133 = vector.load %arg6[%c3_45, %c0_46, %c0_47] : memref<8x2x32xf32, #tpu.memory_space<vmem>>, vector<1x2x32xf32>
    %134 = vector.shape_cast %133 : vector<1x2x32xf32> to vector<2x32xf32>
    %135 = vector.shape_cast %132 : vector<2x32xf32> to vector<1x2x32xf32>
    tpu.vector_store %arg6[%c3_45, %c0_46, %c0_47], %135 {strides = array<i32>} : memref<8x2x32xf32, #tpu.memory_space<vmem>>, vector<1x2x32xf32>,
    %c5 = arith.constant 5 : index
    %c0_48 = arith.constant 0 : index
    %c0_49 = arith.constant 0 : index
    %136 = vector.load %arg8[%c5, %c0_48, %c0_49] : memref<8x2x256xf32, #tpu.memory_space<vmem>>, vector<1x2x256xf32>
    %137 = vector.shape_cast %136 : vector<1x2x256xf32> to vector<2x256xf32>
    %138 = arith.truncf %131 : vector<2x64xf32> to vector<2x64xbf16>
    %cst_50 = arith.constant dense<0.000000e+00> : vector<2x256xf32>
    %139 = tpu.matmul %138, %10, %cst_50 {dimension_numbers = #tpu.dot_dimension_numbers<[1], [0], [0], [1], [0, 0, 1, 1], [], []>} : vector<2x64xbf16>, vector<64x256xbf16>, vector<2x256xf32> -> vector<2x256xf32>
    %140 = arith.addf %137, %139 : vector<2x256xf32>
    %141 = arith.negf %140 : vector<2x256xf32>
    %142 = math.exp %141 : vector<2x256xf32>
    %cst_51 = arith.constant 1.000000e+00 : f32
    %143 = vector.broadcast %cst_51 : f32 to vector<2x256xf32>
    %144 = arith.addf %143, %142 : vector<2x256xf32>
    %145 = arith.divf %143, %144 : vector<2x256xf32>
    %146 = math.tanh %140 : vector<2x256xf32>
    %147 = vector.extract_strided_slice %145 {offsets = [0, 0], sizes = [2, 64], strides = [1, 1]} : vector<2x256xf32> to vector<2x64xf32>
    %148 = vector.extract_strided_slice %145 {offsets = [0, 64], sizes = [2, 64], strides = [1, 1]} : vector<2x256xf32> to vector<2x64xf32>
    %149 = vector.extract_strided_slice %146 {offsets = [0, 128], sizes = [2, 64], strides = [1, 1]} : vector<2x256xf32> to vector<2x64xf32>
    %150 = vector.extract_strided_slice %145 {offsets = [0, 192], sizes = [2, 64], strides = [1, 1]} : vector<2x256xf32> to vector<2x64xf32>
    %151 = arith.mulf %148, %129 : vector<2x64xf32>
    %152 = arith.mulf %147, %149 : vector<2x64xf32>
    %153 = arith.addf %151, %152 : vector<2x64xf32>
    %154 = math.tanh %153 : vector<2x64xf32>
    %155 = arith.mulf %150, %154 : vector<2x64xf32>
    %156 = vector.extract_strided_slice %155 {offsets = [0, 32], sizes = [2, 32], strides = [1, 1]} : vector<2x64xf32> to vector<2x32xf32>
    %c4_52 = arith.constant 4 : index
    %c0_53 = arith.constant 0 : index
    %c0_54 = arith.constant 0 : index
    %157 = vector.load %arg6[%c4_52, %c0_53, %c0_54] : memref<8x2x32xf32, #tpu.memory_space<vmem>>, vector<1x2x32xf32>
    %158 = vector.shape_cast %157 : vector<1x2x32xf32> to vector<2x32xf32>
    %159 = vector.shape_cast %156 : vector<2x32xf32> to vector<1x2x32xf32>
    tpu.vector_store %arg6[%c4_52, %c0_53, %c0_54], %159 {strides = array<i32>} : memref<8x2x32xf32, #tpu.memory_space<vmem>>, vector<1x2x32xf32>,
    %c6 = arith.constant 6 : index
    %c0_55 = arith.constant 0 : index
    %c0_56 = arith.constant 0 : index
    %160 = vector.load %arg8[%c6, %c0_55, %c0_56] : memref<8x2x256xf32, #tpu.memory_space<vmem>>, vector<1x2x256xf32>
    %161 = vector.shape_cast %160 : vector<1x2x256xf32> to vector<2x256xf32>
    %162 = arith.truncf %155 : vector<2x64xf32> to vector<2x64xbf16>
    %cst_57 = arith.constant dense<0.000000e+00> : vector<2x256xf32>
    %163 = tpu.matmul %162, %10, %cst_57 {dimension_numbers = #tpu.dot_dimension_numbers<[1], [0], [0], [1], [0, 0, 1, 1], [], []>} : vector<2x64xbf16>, vector<64x256xbf16>, vector<2x256xf32> -> vector<2x256xf32>
    %164 = arith.addf %161, %163 : vector<2x256xf32>
    %165 = arith.negf %164 : vector<2x256xf32>
    %166 = math.exp %165 : vector<2x256xf32>
    %cst_58 = arith.constant 1.000000e+00 : f32
    %167 = vector.broadcast %cst_58 : f32 to vector<2x256xf32>
    %168 = arith.addf %167, %166 : vector<2x256xf32>
    %169 = arith.divf %167, %168 : vector<2x256xf32>
    %170 = math.tanh %164 : vector<2x256xf32>
    %171 = vector.extract_strided_slice %169 {offsets = [0, 0], sizes = [2, 64], strides = [1, 1]} : vector<2x256xf32> to vector<2x64xf32>
    %172 = vector.extract_strided_slice %169 {offsets = [0, 64], sizes = [2, 64], strides = [1, 1]} : vector<2x256xf32> to vector<2x64xf32>
    %173 = vector.extract_strided_slice %170 {offsets = [0, 128], sizes = [2, 64], strides = [1, 1]} : vector<2x256xf32> to vector<2x64xf32>
    %174 = vector.extract_strided_slice %169 {offsets = [0, 192], sizes = [2, 64], strides = [1, 1]} : vector<2x256xf32> to vector<2x64xf32>
    %175 = arith.mulf %172, %153 : vector<2x64xf32>
    %176 = arith.mulf %171, %173 : vector<2x64xf32>
    %177 = arith.addf %175, %176 : vector<2x64xf32>
    %178 = math.tanh %177 : vector<2x64xf32>
    %179 = arith.mulf %174, %178 : vector<2x64xf32>
    %180 = vector.extract_strided_slice %179 {offsets = [0, 32], sizes = [2, 32], strides = [1, 1]} : vector<2x64xf32> to vector<2x32xf32>
    %c5_59 = arith.constant 5 : index
    %c0_60 = arith.constant 0 : index
    %c0_61 = arith.constant 0 : index
    %181 = vector.load %arg6[%c5_59, %c0_60, %c0_61] : memref<8x2x32xf32, #tpu.memory_space<vmem>>, vector<1x2x32xf32>
    %182 = vector.shape_cast %181 : vector<1x2x32xf32> to vector<2x32xf32>
    %183 = vector.shape_cast %180 : vector<2x32xf32> to vector<1x2x32xf32>
    tpu.vector_store %arg6[%c5_59, %c0_60, %c0_61], %183 {strides = array<i32>} : memref<8x2x32xf32, #tpu.memory_space<vmem>>, vector<1x2x32xf32>,
    %c7 = arith.constant 7 : index
    %c0_62 = arith.constant 0 : index
    %c0_63 = arith.constant 0 : index
    %184 = vector.load %arg8[%c7, %c0_62, %c0_63] : memref<8x2x256xf32, #tpu.memory_space<vmem>>, vector<1x2x256xf32>
    %185 = vector.shape_cast %184 : vector<1x2x256xf32> to vector<2x256xf32>
    %186 = arith.truncf %179 : vector<2x64xf32> to vector<2x64xbf16>
    %cst_64 = arith.constant dense<0.000000e+00> : vector<2x256xf32>
    %187 = tpu.matmul %186, %10, %cst_64 {dimension_numbers = #tpu.dot_dimension_numbers<[1], [0], [0], [1], [0, 0, 1, 1], [], []>} : vector<2x64xbf16>, vector<64x256xbf16>, vector<2x256xf32> -> vector<2x256xf32>
    %188 = arith.addf %185, %187 : vector<2x256xf32>
    %189 = arith.negf %188 : vector<2x256xf32>
    %190 = math.exp %189 : vector<2x256xf32>
    %cst_65 = arith.constant 1.000000e+00 : f32
    %191 = vector.broadcast %cst_65 : f32 to vector<2x256xf32>
    %192 = arith.addf %191, %190 : vector<2x256xf32>
    %193 = arith.divf %191, %192 : vector<2x256xf32>
    %194 = math.tanh %188 : vector<2x256xf32>
    %195 = vector.extract_strided_slice %193 {offsets = [0, 0], sizes = [2, 64], strides = [1, 1]} : vector<2x256xf32> to vector<2x64xf32>
    %196 = vector.extract_strided_slice %193 {offsets = [0, 64], sizes = [2, 64], strides = [1, 1]} : vector<2x256xf32> to vector<2x64xf32>
    %197 = vector.extract_strided_slice %194 {offsets = [0, 128], sizes = [2, 64], strides = [1, 1]} : vector<2x256xf32> to vector<2x64xf32>
    %198 = vector.extract_strided_slice %193 {offsets = [0, 192], sizes = [2, 64], strides = [1, 1]} : vector<2x256xf32> to vector<2x64xf32>
    %199 = arith.mulf %196, %177 : vector<2x64xf32>
    %200 = arith.mulf %195, %197 : vector<2x64xf32>
    %201 = arith.addf %199, %200 : vector<2x64xf32>
    %202 = math.tanh %201 : vector<2x64xf32>
    %203 = arith.mulf %198, %202 : vector<2x64xf32>
    %204 = vector.extract_strided_slice %203 {offsets = [0, 32], sizes = [2, 32], strides = [1, 1]} : vector<2x64xf32> to vector<2x32xf32>
    %c6_66 = arith.constant 6 : index
    %c0_67 = arith.constant 0 : index
    %c0_68 = arith.constant 0 : index
    %205 = vector.load %arg6[%c6_66, %c0_67, %c0_68] : memref<8x2x32xf32, #tpu.memory_space<vmem>>, vector<1x2x32xf32>
    %206 = vector.shape_cast %205 : vector<1x2x32xf32> to vector<2x32xf32>
    %207 = vector.shape_cast %204 : vector<2x32xf32> to vector<1x2x32xf32>
    tpu.vector_store %arg6[%c6_66, %c0_67, %c0_68], %207 {strides = array<i32>} : memref<8x2x32xf32, #tpu.memory_space<vmem>>, vector<1x2x32xf32>,
    %208 = arith.truncf %203 : vector<2x64xf32> to vector<2x64xbf16>
    %cst_69 = arith.constant dense<0.000000e+00> : vector<2x256xf32>
    %209 = tpu.matmul %208, %10, %cst_69 {dimension_numbers = #tpu.dot_dimension_numbers<[1], [0], [0], [1], [0, 0, 1, 1], [], []>} : vector<2x64xbf16>, vector<64x256xbf16>, vector<2x256xf32> -> vector<2x256xf32>
    %210 = vector.broadcast %0 : vector<1x256xf32> to vector<2x256xf32>
    %211 = arith.addf %210, %209 : vector<2x256xf32>
    %212 = arith.negf %211 : vector<2x256xf32>
    %213 = math.exp %212 : vector<2x256xf32>
    %cst_70 = arith.constant 1.000000e+00 : f32
    %214 = vector.broadcast %cst_70 : f32 to vector<2x256xf32>
    %215 = arith.addf %214, %213 : vector<2x256xf32>
    %216 = arith.divf %214, %215 : vector<2x256xf32>
    %217 = math.tanh %211 : vector<2x256xf32>
    %218 = vector.extract_strided_slice %216 {offsets = [0, 0], sizes = [2, 64], strides = [1, 1]} : vector<2x256xf32> to vector<2x64xf32>
    %219 = vector.extract_strided_slice %216 {offsets = [0, 64], sizes = [2, 64], strides = [1, 1]} : vector<2x256xf32> to vector<2x64xf32>
    %220 = vector.extract_strided_slice %217 {offsets = [0, 128], sizes = [2, 64], strides = [1, 1]} : vector<2x256xf32> to vector<2x64xf32>
    %221 = vector.extract_strided_slice %216 {offsets = [0, 192], sizes = [2, 64], strides = [1, 1]} : vector<2x256xf32> to vector<2x64xf32>
    %222 = arith.mulf %219, %201 : vector<2x64xf32>
    %223 = arith.mulf %218, %220 : vector<2x64xf32>
    %224 = arith.addf %222, %223 : vector<2x64xf32>
    %225 = math.tanh %224 : vector<2x64xf32>
    %226 = arith.mulf %221, %225 : vector<2x64xf32>
    %227 = vector.extract_strided_slice %226 {offsets = [0, 32], sizes = [2, 32], strides = [1, 1]} : vector<2x64xf32> to vector<2x32xf32>
    %c7_71 = arith.constant 7 : index
    %c0_72 = arith.constant 0 : index
    %c0_73 = arith.constant 0 : index
    %228 = vector.load %arg6[%c7_71, %c0_72, %c0_73] : memref<8x2x32xf32, #tpu.memory_space<vmem>>, vector<1x2x32xf32>
    %229 = vector.shape_cast %228 : vector<1x2x32xf32> to vector<2x32xf32>
    %230 = vector.shape_cast %227 : vector<2x32xf32> to vector<1x2x32xf32>
    tpu.vector_store %arg6[%c7_71, %c0_72, %c0_73], %230 {strides = array<i32>} : memref<8x2x32xf32, #tpu.memory_space<vmem>>, vector<1x2x32xf32>,
    %231 = arith.truncf %227 : vector<2x32xf32> to vector<2x32xbf16>
    %c0_74 = arith.constant 0 : index
    %c0_75 = arith.constant 0 : index
    %232 = vector.load %arg4[%c0_74, %c0_75] : memref<32x128xbf16, #tpu.memory_space<vmem>>, vector<32x128xbf16>
    %cst_76 = arith.constant dense<0.000000e+00> : vector<2x128xf32>
    %233 = tpu.matmul %231, %232, %cst_76 {dimension_numbers = #tpu.dot_dimension_numbers<[1], [0], [0], [1], [0, 0, 1, 1], [], []>} : vector<2x32xbf16>, vector<32x128xbf16>, vector<2x128xf32> -> vector<2x128xf32>
    %c0_77 = arith.constant 0 : index
    %c0_78 = arith.constant 0 : index
    %234 = vector.load %arg5[%c0_77, %c0_78] : memref<1x128xf32, #tpu.memory_space<vmem>>, vector<1x128xf32>
    %235 = vector.broadcast %234 : vector<1x128xf32> to vector<2x128xf32>
    %236 = arith.addf %233, %235 : vector<2x128xf32>
    %c0_79 = arith.constant 0 : index
    %c0_80 = arith.constant 0 : index
    %237 = vector.load %arg7[%c0_79, %c0_80] : memref<2x128xf32, #tpu.memory_space<vmem>>, vector<2x128xf32>
    tpu.vector_store %arg7[%c0_79, %c0_80], %236 {strides = array<i32>} : memref<2x128xf32, #tpu.memory_space<vmem>>, vector<2x128xf32>,
    return
  }
}

</mosaic_0001>

<llo_original>
// kernel: rnn_forward.1
$region0: #{rnn_forward.1}
  #allocation0 [shape = 'u32[]', space=smem, size = 0x4, offset = 0x4, fixed_abs, tag = 'smem constant byte address 0x4 - core index']
  #allocation1 [shape = 'u32[72,128]{1,0:T(1,128)}', space=vmem, size = 0x9000, scoped, tag = 'internal scratch']
  #allocation2 [shape = 'f32[8,2,256]{2,1,0:T(2,128)}', space=vmem, size = 0x4000, scoped, tag = 'scratch operand']
  %s0 = inlined_call_operand.vmem [shape: f32[8,2,16], index: 0, kind: input, shape index: {}]
  %s1 = inlined_call_operand.vmem [shape: bf16[16,256], index: 1, kind: input, shape index: {}]
  %s2 = inlined_call_operand.hbm [shape: f32[1,256], index: 2, kind: input, shape index: {}]
  %s3 = inlined_call_operand.hbm [shape: bf16[64,256], index: 3, kind: input, shape index: {}]
  %s4 = inlined_call_operand.vmem [shape: bf16[32,128], index: 4, kind: input, shape index: {}]
  %s5 = inlined_call_operand.vmem [shape: f32[1,128], index: 5, kind: input, shape index: {}]
  %s6 = inlined_call_operand.vmem [shape: f32[8,2,32], index: 6, kind: output, shape index: {0}]
  %s7 = inlined_call_operand.hbm [shape: f32[2,128], index: 7, kind: output, shape index: {1}]
  %8 = xla_tuple %s6, %s7
  %s9 = sld [smem:[#allocation0]]
  $region50: #{rnn_forward.1} parent=0
    _
  %s11 = ssub.s32 1, %s9
  %s12 = scalar_select 0, %s11, %s9
  $region1: #{rnn_forward.1} parent=0
    #allocation3 [shape = 'u8[1024]{0}', space=vmem, size = 0x400, scoped, tag = 'input window, operand 2, single buffered']
    #allocation4 [shape = 's32[1]{0}', space=sflag, size = 0x4, scoped, tag = 'scoped memory for rnn_forward.1']
    #allocation5 [shape = 's32[1]{0}', space=sflag, size = 0x4, scoped, tag = 'scoped memory for rnn_forward.1']
    #allocation6 [shape = 'u8[32768]{0}', space=vmem, size = 0x8000, scoped, tag = 'input window, operand 3, single buffered']
    #allocation7 [shape = 's32[1]{0}', space=sflag, size = 0x4, scoped, tag = 'scoped memory for rnn_forward.1']
    #allocation8 [shape = 'u8[1024]{0}', space=vmem, size = 0x400, scoped, tag = 'output window, operand 1, single buffered']
    %13 = vsyncpa [#allocation4], 0
    %14 = vsyncpa [#allocation7], 0
    %15 = vsyncpa [#allocation5], 0
    // Predicated region
    $region2: #{rnn_forward.1} parent=1 // pred_check
      _
    $region3: #{rnn_forward.1} parent=1 // pred_check_branch
      %17 = sbr.rel (0) target = $region5
    $region4: #{rnn_forward.1} parent=1 // pred_region
      _
    $region5: #{rnn_forward.1} parent=1 // pred_fallthru
      _
    // Predicated region
    $region6: #{rnn_forward.1} parent=1 // pred_check
      _
    $region7: #{rnn_forward.1} parent=1 // pred_check_branch
      %19 = sbr.rel (0) target = $region9
    $region8: #{rnn_forward.1} parent=1 // pred_region
      _
    $region9: #{rnn_forward.1} parent=1 // pred_fallthru
      _
    // Predicated region
    $region10: #{rnn_forward.1} parent=1 // pred_check
      _
    $region11: #{rnn_forward.1} parent=1 // pred_check_branch
      %21 = sbr.rel (0) target = $region13
    $region12: #{rnn_forward.1} parent=1 // pred_region
      %23 = vsyncadd [#allocation4], 0
      %s25 = sshll.u32 %s2, 4
      %s26 = int_to_ptr.hbm [resolvable:$true] %s25
      %s27 = sshll.u32 [#allocation3], 4
      %s28 = int_to_ptr.vmem [resolvable:$true] %s27
      %30 = dma.hbm_to_vmem [thread:$0]  %s26, 32, %s28, [#allocation4]
    $region13: #{rnn_forward.1} parent=1 // pred_fallthru
      _
    // Predicated region
    $region14: #{rnn_forward.1} parent=1 // pred_check
      _
    $region15: #{rnn_forward.1} parent=1 // pred_check_branch
      %32 = sbr.rel (0) target = $region17
    $region16: #{rnn_forward.1} parent=1 // pred_region
      %34 = vsyncadd [#allocation7], 0
      %s35 = sshll.u32 %s3, 4
      %s36 = int_to_ptr.hbm [resolvable:$true] %s35
      %s37 = sshll.u32 [#allocation6], 4
      %s38 = int_to_ptr.vmem [resolvable:$true] %s37
      %43 = dma.hbm_to_vmem [thread:$0]  %s36, 1024, %s38, [#allocation7], 128, 128, 8
    $region17: #{rnn_forward.1} parent=1 // pred_fallthru
      _
    // Predicated region
    $region18: #{rnn_forward.1} parent=1 // pred_check
      _
    $region19: #{rnn_forward.1} parent=1 // pred_check_branch
      %45 = sbr.rel (0) target = $region21
    $region20: #{rnn_forward.1} parent=1 // pred_region
      _
    $region21: #{rnn_forward.1} parent=1 // pred_fallthru
      _
    // Predicated region
    $region22: #{rnn_forward.1} parent=1 // pred_check
      _
    $region23: #{rnn_forward.1} parent=1 // pred_check_branch
      %47 = sbr.rel (0) target = $region25
    $region24: #{rnn_forward.1} parent=1 // pred_region
      _
    $region25: #{rnn_forward.1} parent=1 // pred_fallthru
      _
    // Predicated region
    $region26: #{rnn_forward.1} parent=1 // pred_check
      _
    $region27: #{rnn_forward.1} parent=1 // pred_check_branch
      %49 = sbr.rel (0) target = $region29
    $region28: #{rnn_forward.1} parent=1 // pred_region
      %51 = dma.done [#allocation4], 32
    $region29: #{rnn_forward.1} parent=1 // pred_fallthru
      _
    // Predicated region
    $region30: #{rnn_forward.1} parent=1 // pred_check
      _
    $region31: #{rnn_forward.1} parent=1 // pred_check_branch
      %53 = sbr.rel (0) target = $region33
    $region32: #{rnn_forward.1} parent=1 // pred_region
      %55 = dma.done [#allocation7], 1024
    $region33: #{rnn_forward.1} parent=1 // pred_fallthru
      _
    %v57 = vld [vmem:[#allocation3] sm:$0x3]
    %v58 = vld [vmem:[%s0] sm:$0x3]
    %v59 = vld [vmem:[%s0 + $0x2] sm:$0x3]
    %v60 = vld [vmem:[%s0 + $0x4] sm:$0x3]
    %v61 = vld [vmem:[%s0 + $0x6] sm:$0x3]
    %v62 = vld [vmem:[%s0 + $0x8] sm:$0x3]
    %v63 = vld [vmem:[%s0 + $0xa] sm:$0x3]
    %v64 = vld [vmem:[%s0 + $0xc] sm:$0x3]
    %v65 = vld [vmem:[%s0 + $0xe] sm:$0x3]
    %74 = vst [vmem:[#allocation1] ss:$4 sm:$0xff] %v58
    %s75 = scalar_lea.vmem [#allocation1], 1
    %76 = vst [vmem:[%s75] ss:$4 sm:$0xff] %v59
    %s77 = scalar_lea.vmem [#allocation1], 2
    %78 = vst [vmem:[%s77] ss:$4 sm:$0xff] %v60
    %s79 = scalar_lea.vmem [#allocation1], 3
    %80 = vst [vmem:[%s79] ss:$4 sm:$0xff] %v61
    %s81 = scalar_lea.vmem [#allocation1], 32
    %82 = vst [vmem:[%s81] ss:$4 sm:$0xff] %v62
    %s83 = scalar_lea.vmem [#allocation1], 33
    %84 = vst [vmem:[%s83] ss:$4 sm:$0xff] %v63
    %s85 = scalar_lea.vmem [#allocation1], 34
    %86 = vst [vmem:[%s85] ss:$4 sm:$0xff] %v64
    %s87 = scalar_lea.vmem [#allocation1], 35
    %88 = vst [vmem:[%s87] ss:$4 sm:$0xff] %v65
    %v89 = vld.sshfl [vmem:[#allocation1] sm:$0xff pattern:$0x73625140]
    %v90 = vld.sshfl [vmem:[#allocation1 + $0x20] sm:$0xff pattern:$0x73625140]
    %v93 = vpack.c.bf16 %v90, %v89
    %v94 = vld [vmem:[%s1] sm:$0xff]
    %v95 = vld [vmem:[%s1 + $0x8] sm:$0xff]
    %v97 = vperm.slane %v57, 0
    %v98 = vperm.slane %v57, 1
    %v103 = vunpack.c.l.b16 %v94
    %v104 = vunpack.c.h.b16 %v94
    %v105 = vunpack.c.l.b16 %v95
    %v106 = vunpack.c.h.b16 %v95
    %v107 = vpack.c.b16 %v105, %v103
    %v108 = vpack.c.b16 %v106, %v104
    %vm111 = vcmask 130048
    %v113 = vsel %vm111, %v93, 0
    %115 = vmatpush.bf16.msra.mxu0 0
    %116 = vmatpush.bf16.msra.mxu0 0
    %117 = vmatpush.bf16.msra.mxu0 0
    %118 = vmatpush.bf16.msra.mxu0 0
    %119 = vmatpush.bf16.msra.mxu0 0
    %120 = vmatpush.bf16.msra.mxu0 0
    %121 = vmatpush.bf16.msra.mxu0 0
    %122 = vmatpush.bf16.msra.mxu0 %v107
    %123 = vmatmul.bf16.gmra.mxu0 %v113
    %v124 = vpop.f32.mrf.mxu0
    %v125 = vadd.f32 %v97, %v124
    %v126 = vpop.f32.mrf.mxu0
    %v127 = vadd.f32 %v97, %v126
    %128 = vdwg.mxu0
    %129 = vmatpush.bf16.msra.mxu0 0
    %130 = vmatpush.bf16.msra.mxu0 0
    %131 = vmatpush.bf16.msra.mxu0 0
    %132 = vmatpush.bf16.msra.mxu0 0
    %133 = vmatpush.bf16.msra.mxu0 0
    %134 = vmatpush.bf16.msra.mxu0 0
    %135 = vmatpush.bf16.msra.mxu0 0
    %136 = vmatpush.bf16.msra.mxu0 %v108
    %137 = vmatmul.bf16.gmra.mxu0 %v113
    %v138 = vpop.f32.mrf.mxu0
    %v139 = vadd.f32 %v98, %v138
    %v140 = vpop.f32.mrf.mxu0
    %v141 = vadd.f32 %v98, %v140
    %142 = vdwg.mxu0
    %v147 = vrot.slane %v139, 6
    %v148 = vrot.slane %v141, 6
    %vm149 = vcmask 1041408
    %v150 = vsel %vm149, %v125, %v147
    %vm151 = vcmask 1043458
    %v152 = vsel %vm151, %v125, %v147
    %v153 = vrot.slane %v152, 2
    %vm154 = vcmask 1045508
    %v155 = vsel %vm154, %v125, %v147
    %v156 = vrot.slane %v155, 4
    %vm157 = vcmask 1045504
    %v158 = vsel %vm157, %v147, %v125
    %v159 = vrot.slane %v158, 6
    %v160 = vsel %vm149, %v127, %v148
    %v161 = vsel %vm151, %v127, %v148
    %v162 = vrot.slane %v161, 2
    %v163 = vsel %vm154, %v127, %v148
    %v164 = vrot.slane %v163, 4
    %v165 = vsel %vm157, %v148, %v127
    %v166 = vrot.slane %v165, 6
    %175 = vst [vmem:[#allocation2] sm:$0xf] %v150
    %176 = vst [vmem:[#allocation2 + $0x4] sm:$0xf] %v153
    %177 = vst [vmem:[#allocation2 + $0x8] sm:$0xf] %v156
    %178 = vst [vmem:[#allocation2 + $0xc] sm:$0xf] %v159
    %179 = vst [vmem:[#allocation2 + $0x10] sm:$0xf] %v160
    %180 = vst [vmem:[#allocation2 + $0x14] sm:$0xf] %v162
    %181 = vst [vmem:[#allocation2 + $0x18] sm:$0xf] %v164
    %182 = vst [vmem:[#allocation2 + $0x1c] sm:$0xf] %v166
    %v183 = vld [vmem:[#allocation6] sm:$0xff]
    %v184 = vld [vmem:[#allocation6 + $0x8] sm:$0xff]
    %v185 = vld [vmem:[#allocation6 + $0x10] sm:$0xff]
    %v186 = vld [vmem:[#allocation6 + $0x18] sm:$0xff]
    %v187 = vld [vmem:[#allocation6 + $0x20] sm:$0xff]
    %v188 = vld [vmem:[#allocation6 + $0x28] sm:$0xff]
    %v189 = vld [vmem:[#allocation6 + $0x30] sm:$0xff]
    %v190 = vld [vmem:[#allocation6 + $0x38] sm:$0xff]
    %v191 = vlaneseq
    %v192 = vand.u32 %v191, 127
    %vm193 = vcmp.lt.s32.totalorder %v192, 32
    %v194 = vld [vmem:[#allocation2] sm:$0xf]
    %v203 = vunpack.c.l.b16 %v183
    %v204 = vunpack.c.h.b16 %v183
    %v205 = vunpack.c.l.b16 %v184
    %v206 = vunpack.c.h.b16 %v184
    %v207 = vunpack.c.l.b16 %v185
    %v208 = vunpack.c.h.b16 %v185
    %v209 = vunpack.c.l.b16 %v186
    %v210 = vunpack.c.h.b16 %v186
    %v211 = vunpack.c.l.b16 %v187
    %v212 = vunpack.c.h.b16 %v187
    %v213 = vunpack.c.l.b16 %v188
    %v214 = vunpack.c.h.b16 %v188
    %v215 = vunpack.c.l.b16 %v189
    %v216 = vunpack.c.h.b16 %v189
    %v217 = vunpack.c.l.b16 %v190
    %v218 = vunpack.c.h.b16 %v190
    %v219 = vpack.c.b16 %v205, %v203
    %v220 = vpack.c.b16 %v206, %v204
    %v221 = vpack.c.b16 %v209, %v207
    %v222 = vpack.c.b16 %v210, %v208
    %v223 = vpack.c.b16 %v213, %v211
    %v224 = vpack.c.b16 %v214, %v212
    %v225 = vpack.c.b16 %v217, %v215
    %v226 = vpack.c.b16 %v218, %v216
    %vm235 = vcmask 523264
    %v237 = vsel %vm235, 0, 0
    %239 = vmatpush.bf16.msra.mxu0 0
    %240 = vmatpush.bf16.msra.mxu0 0
    %241 = vmatpush.bf16.msra.mxu0 0
    %242 = vmatpush.bf16.msra.mxu0 0
    %243 = vmatpush.bf16.msra.mxu0 %v225
    %244 = vmatpush.bf16.msra.mxu0 %v223
    %245 = vmatpush.bf16.msra.mxu0 %v221
    %246 = vmatpush.bf16.msra.mxu0 %v219
    %247 = vmatmul.bf16.gmra.mxu0 %v237
    %v248 = vpop.f32.mrf.mxu0
    %v249 = vadd.f32 0.0, %v248
    %v250 = vpop.f32.mrf.mxu0
    %251 = vdwg.mxu0
    %252 = vmatpush.bf16.msra.mxu0 0
    %253 = vmatpush.bf16.msra.mxu0 0
    %254 = vmatpush.bf16.msra.mxu0 0
    %255 = vmatpush.bf16.msra.mxu0 0
    %256 = vmatpush.bf16.msra.mxu0 %v226
    %257 = vmatpush.bf16.msra.mxu0 %v224
    %258 = vmatpush.bf16.msra.mxu0 %v222
    %259 = vmatpush.bf16.msra.mxu0 %v220
    %260 = vmatmul.bf16.gmra.mxu0 %v237
    %v261 = vpop.f32.mrf.mxu0
    %v262 = vadd.f32 0.0, %v261
    %v263 = vpop.f32.mrf.mxu0
    %264 = vdwg.mxu0
    %v267 = vrot.slane %v262, 6
    %v268 = vsel %vm149, %v249, %v267
    %v270 = vadd.f32 %v194, %v268
    %v271 = vxor.u32 %v270, 2147483648
    %v272 = vmul.f32 %v271, 1.442695
    %v273 = vpow.pop %v272
    %v274 = vadd.f32 %v273, 1.0
    %v275 = vrcp.pop %v274
    %v276 = vmul.f32 %v274, %v275
    %v277 = vsub.f32 1.0, %v276
    %v278 = vmul.f32 %v275, %v277
    %v279 = vadd.f32 %v275, %v278
    %vm280 = vweird.f32 %v274
    %vm281 = vweird.f32 %v275
    %vm282 = vmor %vm280, %vm281
    %v283 = vsel %vm282, %v275, %v279
    %v284 = vand.u32 2147483647, %v274
    %vm285 = vcmp.eq.f32.partialorder %v284, 8.507059e+37
    %v286 = vand.u32 %v274, 2147483648
    %v287 = vor.u32 1.1754944e-38, %v286
    %v288 = vsel %vm285, %v287, %v283
    %v289 = vmul.f32 1.0, %v288
    %v290 = vtanh.pop %v270
    %v291 = vmul.f32 %v289, 0.0
    %v293 = vrot.slane %v290, 2
    %v295 = vmul.f32 %v289, %v293
    %297 = vrot.lane.b32.xlu0 %v295, 64
    %v298 = vpop.permute.xlu0 %297
    %v300 = vadd.f32 %v291, %v298
    %v301 = vtanh.pop %v300
    %303 = vrot.lane.b32.xlu0 %v289, 64
    %v304 = vpop.permute.xlu0 %303
    %v305 = vrot.slane %v304, 2
    %308 = vrot.lane.b32.xlu0 %v301, 64
    %v309 = vpop.permute.xlu0 %308
    %v311 = vmul.f32 %v305, %v309
    %313 = vst [vmem:[#allocation1] ss:$4 sm:$0xff] %v300
    %v314 = vld.sshfl [vmem:[#allocation1] sm:$0xff pattern:$0x73625140]
    %315 = vrot.lane.b32.xlu0 %v314, 64
    %v316 = vpop.permute.xlu0 %315
    %v318 = vsel %vm193, %v316, 0.0
    %v319 = vsel %vm193, %v311, 0.0
    %s320 = scalar_lea.vmem [#allocation2], 4
    %v321 = vld [vmem:[%s320] sm:$0xf]
    %v322 = vpack.c.bf16 %v319, %v319
    %v324 = vsel %vm235, %v322, 0
    %326 = vmatpush.bf16.msra.mxu0 0
    %327 = vmatpush.bf16.msra.mxu0 0
    %328 = vmatpush.bf16.msra.mxu0 0
    %329 = vmatpush.bf16.msra.mxu0 0
    %330 = vmatpush.bf16.msra.mxu0 %v225
    %331 = vmatpush.bf16.msra.mxu0 %v223
    %332 = vmatpush.bf16.msra.mxu0 %v221
    %333 = vmatpush.bf16.msra.mxu0 %v219
    %334 = vmatmul.bf16.gmra.mxu0 %v324
    %v335 = vpop.f32.mrf.mxu0
    %v336 = vadd.f32 0.0, %v335
    %v337 = vpop.f32.mrf.mxu0
    %338 = vdwg.mxu0
    %339 = vmatpush.bf16.msra.mxu0 0
    %340 = vmatpush.bf16.msra.mxu0 0
    %341 = vmatpush.bf16.msra.mxu0 0
    %342 = vmatpush.bf16.msra.mxu0 0
    %343 = vmatpush.bf16.msra.mxu0 %v226
    %344 = vmatpush.bf16.msra.mxu0 %v224
    %345 = vmatpush.bf16.msra.mxu0 %v222
    %346 = vmatpush.bf16.msra.mxu0 %v220
    %347 = vmatmul.bf16.gmra.mxu0 %v324
    %v348 = vpop.f32.mrf.mxu0
    %v349 = vadd.f32 0.0, %v348
    %v350 = vpop.f32.mrf.mxu0
    %351 = vdwg.mxu0
    %v354 = vrot.slane %v349, 6
    %v355 = vsel %vm149, %v336, %v354
    %v357 = vadd.f32 %v321, %v355
    %v358 = vxor.u32 %v357, 2147483648
    %v359 = vmul.f32 %v358, 1.442695
    %v360 = vpow.pop %v359
    %v361 = vadd.f32 %v360, 1.0
    %v362 = vrcp.pop %v361
    %v363 = vmul.f32 %v361, %v362
    %v364 = vsub.f32 1.0, %v363
    %v365 = vmul.f32 %v362, %v364
    %v366 = vadd.f32 %v362, %v365
    %vm367 = vweird.f32 %v361
    %vm368 = vweird.f32 %v362
    %vm369 = vmor %vm367, %vm368
    %v370 = vsel %vm369, %v362, %v366
    %v371 = vand.u32 2147483647, %v361
    %vm372 = vcmp.eq.f32.partialorder %v371, 8.507059e+37
    %v373 = vand.u32 %v361, 2147483648
    %v374 = vor.u32 1.1754944e-38, %v373
    %v375 = vsel %vm372, %v374, %v370
    %v376 = vmul.f32 1.0, %v375
    %v377 = vtanh.pop %v357
    %379 = vrot.lane.b32.xlu0 %v318, 64
    %v380 = vpop.permute.xlu0 %379
    %v382 = vmul.f32 %v376, %v380
    %v384 = vrot.slane %v377, 2
    %v386 = vmul.f32 %v376, %v384
    %388 = vrot.lane.b32.xlu0 %v386, 64
    %v389 = vpop.permute.xlu0 %388
    %v391 = vadd.f32 %v382, %v389
    %v392 = vtanh.pop %v391
    %394 = vrot.lane.b32.xlu0 %v376, 64
    %v395 = vpop.permute.xlu0 %394
    %v396 = vrot.slane %v395, 2
    %399 = vrot.lane.b32.xlu0 %v392, 64
    %v400 = vpop.permute.xlu0 %399
    %v402 = vmul.f32 %v396, %v400
    %404 = vst [vmem:[#allocation1] ss:$4 sm:$0xff] %v402
    %v405 = vld.sshfl [vmem:[#allocation1] sm:$0xff pattern:$0x73625140]
    %406 = vrot.lane.b32.xlu0 %v405, 96
    %v407 = vpop.permute.xlu0 %406
    %vm409 = vcmask 254976
    %410 = vst.msk [vmem:[%s6] sm:$0x3] %vm409, %v407
    %s411 = scalar_lea.vmem [#allocation2], 8
    %v412 = vld [vmem:[%s411] sm:$0xf]
    %v413 = vpack.c.bf16 %v402, %v402
    %v415 = vsel %vm235, %v413, 0
    %417 = vmatpush.bf16.msra.mxu0 0
    %418 = vmatpush.bf16.msra.mxu0 0
    %419 = vmatpush.bf16.msra.mxu0 0
    %420 = vmatpush.bf16.msra.mxu0 0
    %421 = vmatpush.bf16.msra.mxu0 %v225
    %422 = vmatpush.bf16.msra.mxu0 %v223
    %423 = vmatpush.bf16.msra.mxu0 %v221
    %424 = vmatpush.bf16.msra.mxu0 %v219
    %425 = vmatmul.bf16.gmra.mxu0 %v415
    %v426 = vpop.f32.mrf.mxu0
    %v427 = vadd.f32 0.0, %v426
    %v428 = vpop.f32.mrf.mxu0
    %429 = vdwg.mxu0
    %430 = vmatpush.bf16.msra.mxu0 0
    %431 = vmatpush.bf16.msra.mxu0 0
    %432 = vmatpush.bf16.msra.mxu0 0
    %433 = vmatpush.bf16.msra.mxu0 0
    %434 = vmatpush.bf16.msra.mxu0 %v226
    %435 = vmatpush.bf16.msra.mxu0 %v224
    %436 = vmatpush.bf16.msra.mxu0 %v222
    %437 = vmatpush.bf16.msra.mxu0 %v220
    %438 = vmatmul.bf16.gmra.mxu0 %v415
    %v439 = vpop.f32.mrf.mxu0
    %v440 = vadd.f32 0.0, %v439
    %v441 = vpop.f32.mrf.mxu0
    %442 = vdwg.mxu0
    %v445 = vrot.slane %v440, 6
    %v446 = vsel %vm149, %v427, %v445
    %v448 = vadd.f32 %v412, %v446
    %v449 = vxor.u32 %v448, 2147483648
    %v450 = vmul.f32 %v449, 1.442695
    %v451 = vpow.pop %v450
    %v452 = vadd.f32 %v451, 1.0
    %v453 = vrcp.pop %v452
    %v454 = vmul.f32 %v452, %v453
    %v455 = vsub.f32 1.0, %v454
    %v456 = vmul.f32 %v453, %v455
    %v457 = vadd.f32 %v453, %v456
    %vm458 = vweird.f32 %v452
    %vm459 = vweird.f32 %v453
    %vm460 = vmor %vm458, %vm459
    %v461 = vsel %vm460, %v453, %v457
    %v462 = vand.u32 2147483647, %v452
    %vm463 = vcmp.eq.f32.partialorder %v462, 8.507059e+37
    %v464 = vand.u32 %v452, 2147483648
    %v465 = vor.u32 1.1754944e-38, %v464
    %v466 = vsel %vm463, %v465, %v461
    %v467 = vmul.f32 1.0, %v466
    %v468 = vtanh.pop %v448
    %v469 = vmul.f32 %v467, %v391
    %v471 = vrot.slane %v468, 2
    %v473 = vmul.f32 %v467, %v471
    %475 = vrot.lane.b32.xlu0 %v473, 64
    %v476 = vpop.permute.xlu0 %475
    %v478 = vadd.f32 %v469, %v476
    %v479 = vtanh.pop %v478
    %481 = vrot.lane.b32.xlu0 %v467, 64
    %v482 = vpop.permute.xlu0 %481
    %v483 = vrot.slane %v482, 2
    %486 = vrot.lane.b32.xlu0 %v479, 64
    %v487 = vpop.permute.xlu0 %486
    %v489 = vmul.f32 %v483, %v487
    %491 = vst [vmem:[#allocation1] ss:$4 sm:$0xff] %v489
    %v492 = vld.sshfl [vmem:[#allocation1] sm:$0xff pattern:$0x73625140]
    %493 = vrot.lane.b32.xlu0 %v492, 96
    %v494 = vpop.permute.xlu0 %493
    %s496 = scalar_lea.vmem %s6, 2
    %497 = vst.msk [vmem:[%s496] sm:$0x3] %vm409, %v494
    %s498 = scalar_lea.vmem [#allocation2], 12
    %v499 = vld [vmem:[%s498] sm:$0xf]
    %v500 = vpack.c.bf16 %v489, %v489
    %v502 = vsel %vm235, %v500, 0
    %504 = vmatpush.bf16.msra.mxu0 0
    %505 = vmatpush.bf16.msra.mxu0 0
    %506 = vmatpush.bf16.msra.mxu0 0
    %507 = vmatpush.bf16.msra.mxu0 0
    %508 = vmatpush.bf16.msra.mxu0 %v225
    %509 = vmatpush.bf16.msra.mxu0 %v223
    %510 = vmatpush.bf16.msra.mxu0 %v221
    %511 = vmatpush.bf16.msra.mxu0 %v219
    %512 = vmatmul.bf16.gmra.mxu0 %v502
    %v513 = vpop.f32.mrf.mxu0
    %v514 = vadd.f32 0.0, %v513
    %v515 = vpop.f32.mrf.mxu0
    %516 = vdwg.mxu0
    %517 = vmatpush.bf16.msra.mxu0 0
    %518 = vmatpush.bf16.msra.mxu0 0
    %519 = vmatpush.bf16.msra.mxu0 0
    %520 = vmatpush.bf16.msra.mxu0 0
    %521 = vmatpush.bf16.msra.mxu0 %v226
    %522 = vmatpush.bf16.msra.mxu0 %v224
    %523 = vmatpush.bf16.msra.mxu0 %v222
    %524 = vmatpush.bf16.msra.mxu0 %v220
    %525 = vmatmul.bf16.gmra.mxu0 %v502
    %v526 = vpop.f32.mrf.mxu0
    %v527 = vadd.f32 0.0, %v526
    %v528 = vpop.f32.mrf.mxu0
    %529 = vdwg.mxu0
    %v532 = vrot.slane %v527, 6
    %v533 = vsel %vm149, %v514, %v532
    %v535 = vadd.f32 %v499, %v533
    %v536 = vxor.u32 %v535, 2147483648
    %v537 = vmul.f32 %v536, 1.442695
    %v538 = vpow.pop %v537
    %v539 = vadd.f32 %v538, 1.0
    %v540 = vrcp.pop %v539
    %v541 = vmul.f32 %v539, %v540
    %v542 = vsub.f32 1.0, %v541
    %v543 = vmul.f32 %v540, %v542
    %v544 = vadd.f32 %v540, %v543
    %vm545 = vweird.f32 %v539
    %vm546 = vweird.f32 %v540
    %vm547 = vmor %vm545, %vm546
    %v548 = vsel %vm547, %v540, %v544
    %v549 = vand.u32 2147483647, %v539
    %vm550 = vcmp.eq.f32.partialorder %v549, 8.507059e+37
    %v551 = vand.u32 %v539, 2147483648
    %v552 = vor.u32 1.1754944e-38, %v551
    %v553 = vsel %vm550, %v552, %v548
    %v554 = vmul.f32 1.0, %v553
    %v555 = vtanh.pop %v535
    %v556 = vmul.f32 %v554, %v478
    %v558 = vrot.slane %v555, 2
    %v560 = vmul.f32 %v554, %v558
    %562 = vrot.lane.b32.xlu0 %v560, 64
    %v563 = vpop.permute.xlu0 %562
    %v565 = vadd.f32 %v556, %v563
    %v566 = vtanh.pop %v565
    %568 = vrot.lane.b32.xlu0 %v554, 64
    %v569 = vpop.permute.xlu0 %568
    %v570 = vrot.slane %v569, 2
    %573 = vrot.lane.b32.xlu0 %v566, 64
    %v574 = vpop.permute.xlu0 %573
    %v576 = vmul.f32 %v570, %v574
    %578 = vst [vmem:[#allocation1] ss:$4 sm:$0xff] %v576
    %v579 = vld.sshfl [vmem:[#allocation1] sm:$0xff pattern:$0x73625140]
    %580 = vrot.lane.b32.xlu0 %v579, 96
    %v581 = vpop.permute.xlu0 %580
    %s583 = scalar_lea.vmem %s6, 4
    %584 = vst.msk [vmem:[%s583] sm:$0x3] %vm409, %v581
    %s585 = scalar_lea.vmem [#allocation2], 16
    %v586 = vld [vmem:[%s585] sm:$0xf]
    %v587 = vpack.c.bf16 %v576, %v576
    %v589 = vsel %vm235, %v587, 0
    %591 = vmatpush.bf16.msra.mxu0 0
    %592 = vmatpush.bf16.msra.mxu0 0
    %593 = vmatpush.bf16.msra.mxu0 0
    %594 = vmatpush.bf16.msra.mxu0 0
    %595 = vmatpush.bf16.msra.mxu0 %v225
    %596 = vmatpush.bf16.msra.mxu0 %v223
    %597 = vmatpush.bf16.msra.mxu0 %v221
    %598 = vmatpush.bf16.msra.mxu0 %v219
    %599 = vmatmul.bf16.gmra.mxu0 %v589
    %v600 = vpop.f32.mrf.mxu0
    %v601 = vadd.f32 0.0, %v600
    %v602 = vpop.f32.mrf.mxu0
    %603 = vdwg.mxu0
    %604 = vmatpush.bf16.msra.mxu0 0
    %605 = vmatpush.bf16.msra.mxu0 0
    %606 = vmatpush.bf16.msra.mxu0 0
    %607 = vmatpush.bf16.msra.mxu0 0
    %608 = vmatpush.bf16.msra.mxu0 %v226
    %609 = vmatpush.bf16.msra.mxu0 %v224
    %610 = vmatpush.bf16.msra.mxu0 %v222
    %611 = vmatpush.bf16.msra.mxu0 %v220
    %612 = vmatmul.bf16.gmra.mxu0 %v589
    %v613 = vpop.f32.mrf.mxu0
    %v614 = vadd.f32 0.0, %v613
    %v615 = vpop.f32.mrf.mxu0
    %616 = vdwg.mxu0
    %v619 = vrot.slane %v614, 6
    %v620 = vsel %vm149, %v601, %v619
    %v622 = vadd.f32 %v586, %v620
    %v623 = vxor.u32 %v622, 2147483648
    %v624 = vmul.f32 %v623, 1.442695
    %v625 = vpow.pop %v624
    %v626 = vadd.f32 %v625, 1.0
    %v627 = vrcp.pop %v626
    %v628 = vmul.f32 %v626, %v627
    %v629 = vsub.f32 1.0, %v628
    %v630 = vmul.f32 %v627, %v629
    %v631 = vadd.f32 %v627, %v630
    %vm632 = vweird.f32 %v626
    %vm633 = vweird.f32 %v627
    %vm634 = vmor %vm632, %vm633
    %v635 = vsel %vm634, %v627, %v631
    %v636 = vand.u32 2147483647, %v626
    %vm637 = vcmp.eq.f32.partialorder %v636, 8.507059e+37
    %v638 = vand.u32 %v626, 2147483648
    %v639 = vor.u32 1.1754944e-38, %v638
    %v640 = vsel %vm637, %v639, %v635
    %v641 = vmul.f32 1.0, %v640
    %v642 = vtanh.pop %v622
    %v643 = vmul.f32 %v641, %v565
    %v645 = vrot.slane %v642, 2
    %v647 = vmul.f32 %v641, %v645
    %649 = vrot.lane.b32.xlu0 %v647, 64
    %v650 = vpop.permute.xlu0 %649
    %v652 = vadd.f32 %v643, %v650
    %v653 = vtanh.pop %v652
    %655 = vrot.lane.b32.xlu0 %v641, 64
    %v656 = vpop.permute.xlu0 %655
    %v657 = vrot.slane %v656, 2
    %660 = vrot.lane.b32.xlu0 %v653, 64
    %v661 = vpop.permute.xlu0 %660
    %v663 = vmul.f32 %v657, %v661
    %665 = vst [vmem:[#allocation1] ss:$4 sm:$0xff] %v663
    %v666 = vld.sshfl [vmem:[#allocation1] sm:$0xff pattern:$0x73625140]
    %667 = vrot.lane.b32.xlu0 %v666, 96
    %v668 = vpop.permute.xlu0 %667
    %s670 = scalar_lea.vmem %s6, 6
    %671 = vst.msk [vmem:[%s670] sm:$0x3] %vm409, %v668
    %s672 = scalar_lea.vmem [#allocation2], 20
    %v673 = vld [vmem:[%s672] sm:$0xf]
    %v674 = vpack.c.bf16 %v663, %v663
    %v676 = vsel %vm235, %v674, 0
    %678 = vmatpush.bf16.msra.mxu0 0
    %679 = vmatpush.bf16.msra.mxu0 0
    %680 = vmatpush.bf16.msra.mxu0 0
    %681 = vmatpush.bf16.msra.mxu0 0
    %682 = vmatpush.bf16.msra.mxu0 %v225
    %683 = vmatpush.bf16.msra.mxu0 %v223
    %684 = vmatpush.bf16.msra.mxu0 %v221
    %685 = vmatpush.bf16.msra.mxu0 %v219
    %686 = vmatmul.bf16.gmra.mxu0 %v676
    %v687 = vpop.f32.mrf.mxu0
    %v688 = vadd.f32 0.0, %v687
    %v689 = vpop.f32.mrf.mxu0
    %690 = vdwg.mxu0
    %691 = vmatpush.bf16.msra.mxu0 0
    %692 = vmatpush.bf16.msra.mxu0 0
    %693 = vmatpush.bf16.msra.mxu0 0
    %694 = vmatpush.bf16.msra.mxu0 0
    %695 = vmatpush.bf16.msra.mxu0 %v226
    %696 = vmatpush.bf16.msra.mxu0 %v224
    %697 = vmatpush.bf16.msra.mxu0 %v222
    %698 = vmatpush.bf16.msra.mxu0 %v220
    %699 = vmatmul.bf16.gmra.mxu0 %v676
    %v700 = vpop.f32.mrf.mxu0
    %v701 = vadd.f32 0.0, %v700
    %v702 = vpop.f32.mrf.mxu0
    %703 = vdwg.mxu0
    %v706 = vrot.slane %v701, 6
    %v707 = vsel %vm149, %v688, %v706
    %v709 = vadd.f32 %v673, %v707
    %v710 = vxor.u32 %v709, 2147483648
    %v711 = vmul.f32 %v710, 1.442695
    %v712 = vpow.pop %v711
    %v713 = vadd.f32 %v712, 1.0
    %v714 = vrcp.pop %v713
    %v715 = vmul.f32 %v713, %v714
    %v716 = vsub.f32 1.0, %v715
    %v717 = vmul.f32 %v714, %v716
    %v718 = vadd.f32 %v714, %v717
    %vm719 = vweird.f32 %v713
    %vm720 = vweird.f32 %v714
    %vm721 = vmor %vm719, %vm720
    %v722 = vsel %vm721, %v714, %v718
    %v723 = vand.u32 2147483647, %v713
    %vm724 = vcmp.eq.f32.partialorder %v723, 8.507059e+37
    %v725 = vand.u32 %v713, 2147483648
    %v726 = vor.u32 1.1754944e-38, %v725
    %v727 = vsel %vm724, %v726, %v722
    %v728 = vmul.f32 1.0, %v727
    %v729 = vtanh.pop %v709
    %v730 = vmul.f32 %v728, %v652
    %v732 = vrot.slane %v729, 2
    %v734 = vmul.f32 %v728, %v732
    %736 = vrot.lane.b32.xlu0 %v734, 64
    %v737 = vpop.permute.xlu0 %736
    %v739 = vadd.f32 %v730, %v737
    %v740 = vtanh.pop %v739
    %742 = vrot.lane.b32.xlu0 %v728, 64
    %v743 = vpop.permute.xlu0 %742
    %v744 = vrot.slane %v743, 2
    %747 = vrot.lane.b32.xlu0 %v740, 64
    %v748 = vpop.permute.xlu0 %747
    %v750 = vmul.f32 %v744, %v748
    %752 = vst [vmem:[#allocation1] ss:$4 sm:$0xff] %v750
    %v753 = vld.sshfl [vmem:[#allocation1] sm:$0xff pattern:$0x73625140]
    %754 = vrot.lane.b32.xlu0 %v753, 96
    %v755 = vpop.permute.xlu0 %754
    %s757 = scalar_lea.vmem %s6, 8
    %758 = vst.msk [vmem:[%s757] sm:$0x3] %vm409, %v755
    %s759 = scalar_lea.vmem [#allocation2], 24
    %v760 = vld [vmem:[%s759] sm:$0xf]
    %v761 = vpack.c.bf16 %v750, %v750
    %v763 = vsel %vm235, %v761, 0
    %765 = vmatpush.bf16.msra.mxu0 0
    %766 = vmatpush.bf16.msra.mxu0 0
    %767 = vmatpush.bf16.msra.mxu0 0
    %768 = vmatpush.bf16.msra.mxu0 0
    %769 = vmatpush.bf16.msra.mxu0 %v225
    %770 = vmatpush.bf16.msra.mxu0 %v223
    %771 = vmatpush.bf16.msra.mxu0 %v221
    %772 = vmatpush.bf16.msra.mxu0 %v219
    %773 = vmatmul.bf16.gmra.mxu0 %v763
    %v774 = vpop.f32.mrf.mxu0
    %v775 = vadd.f32 0.0, %v774
    %v776 = vpop.f32.mrf.mxu0
    %777 = vdwg.mxu0
    %778 = vmatpush.bf16.msra.mxu0 0
    %779 = vmatpush.bf16.msra.mxu0 0
    %780 = vmatpush.bf16.msra.mxu0 0
    %781 = vmatpush.bf16.msra.mxu0 0
    %782 = vmatpush.bf16.msra.mxu0 %v226
    %783 = vmatpush.bf16.msra.mxu0 %v224
    %784 = vmatpush.bf16.msra.mxu0 %v222
    %785 = vmatpush.bf16.msra.mxu0 %v220
    %786 = vmatmul.bf16.gmra.mxu0 %v763
    %v787 = vpop.f32.mrf.mxu0
    %v788 = vadd.f32 0.0, %v787
    %v789 = vpop.f32.mrf.mxu0
    %790 = vdwg.mxu0
    %v793 = vrot.slane %v788, 6
    %v794 = vsel %vm149, %v775, %v793
    %v796 = vadd.f32 %v760, %v794
    %v797 = vxor.u32 %v796, 2147483648
    %v798 = vmul.f32 %v797, 1.442695
    %v799 = vpow.pop %v798
    %v800 = vadd.f32 %v799, 1.0
    %v801 = vrcp.pop %v800
    %v802 = vmul.f32 %v800, %v801
    %v803 = vsub.f32 1.0, %v802
    %v804 = vmul.f32 %v801, %v803
    %v805 = vadd.f32 %v801, %v804
    %vm806 = vweird.f32 %v800
    %vm807 = vweird.f32 %v801
    %vm808 = vmor %vm806, %vm807
    %v809 = vsel %vm808, %v801, %v805
    %v810 = vand.u32 2147483647, %v800
    %vm811 = vcmp.eq.f32.partialorder %v810, 8.507059e+37
    %v812 = vand.u32 %v800, 2147483648
    %v813 = vor.u32 1.1754944e-38, %v812
    %v814 = vsel %vm811, %v813, %v809
    %v815 = vmul.f32 1.0, %v814
    %v816 = vtanh.pop %v796
    %v817 = vmul.f32 %v815, %v739
    %v819 = vrot.slane %v816, 2
    %v821 = vmul.f32 %v815, %v819
    %823 = vrot.lane.b32.xlu0 %v821, 64
    %v824 = vpop.permute.xlu0 %823
    %v826 = vadd.f32 %v817, %v824
    %v827 = vtanh.pop %v826
    %829 = vrot.lane.b32.xlu0 %v815, 64
    %v830 = vpop.permute.xlu0 %829
    %v831 = vrot.slane %v830, 2
    %834 = vrot.lane.b32.xlu0 %v827, 64
    %v835 = vpop.permute.xlu0 %834
    %v837 = vmul.f32 %v831, %v835
    %839 = vst [vmem:[#allocation1] ss:$4 sm:$0xff] %v837
    %v840 = vld.sshfl [vmem:[#allocation1] sm:$0xff pattern:$0x73625140]
    %841 = vrot.lane.b32.xlu0 %v840, 96
    %v842 = vpop.permute.xlu0 %841
    %s844 = scalar_lea.vmem %s6, 10
    %845 = vst.msk [vmem:[%s844] sm:$0x3] %vm409, %v842
    %s846 = scalar_lea.vmem [#allocation2], 28
    %v847 = vld [vmem:[%s846] sm:$0xf]
    %v848 = vpack.c.bf16 %v837, %v837
    %v850 = vsel %vm235, %v848, 0
    %852 = vmatpush.bf16.msra.mxu0 0
    %853 = vmatpush.bf16.msra.mxu0 0
    %854 = vmatpush.bf16.msra.mxu0 0
    %855 = vmatpush.bf16.msra.mxu0 0
    %856 = vmatpush.bf16.msra.mxu0 %v225
    %857 = vmatpush.bf16.msra.mxu0 %v223
    %858 = vmatpush.bf16.msra.mxu0 %v221
    %859 = vmatpush.bf16.msra.mxu0 %v219
    %860 = vmatmul.bf16.gmra.mxu0 %v850
    %v861 = vpop.f32.mrf.mxu0
    %v862 = vadd.f32 0.0, %v861
    %v863 = vpop.f32.mrf.mxu0
    %864 = vdwg.mxu0
    %865 = vmatpush.bf16.msra.mxu0 0
    %866 = vmatpush.bf16.msra.mxu0 0
    %867 = vmatpush.bf16.msra.mxu0 0
    %868 = vmatpush.bf16.msra.mxu0 0
    %869 = vmatpush.bf16.msra.mxu0 %v226
    %870 = vmatpush.bf16.msra.mxu0 %v224
    %871 = vmatpush.bf16.msra.mxu0 %v222
    %872 = vmatpush.bf16.msra.mxu0 %v220
    %873 = vmatmul.bf16.gmra.mxu0 %v850
    %v874 = vpop.f32.mrf.mxu0
    %v875 = vadd.f32 0.0, %v874
    %v876 = vpop.f32.mrf.mxu0
    %877 = vdwg.mxu0
    %v880 = vrot.slane %v875, 6
    %v881 = vsel %vm149, %v862, %v880
    %v883 = vadd.f32 %v847, %v881
    %v884 = vxor.u32 %v883, 2147483648
    %v885 = vmul.f32 %v884, 1.442695
    %v886 = vpow.pop %v885
    %v887 = vadd.f32 %v886, 1.0
    %v888 = vrcp.pop %v887
    %v889 = vmul.f32 %v887, %v888
    %v890 = vsub.f32 1.0, %v889
    %v891 = vmul.f32 %v888, %v890
    %v892 = vadd.f32 %v888, %v891
    %vm893 = vweird.f32 %v887
    %vm894 = vweird.f32 %v888
    %vm895 = vmor %vm893, %vm894
    %v896 = vsel %vm895, %v888, %v892
    %v897 = vand.u32 2147483647, %v887
    %vm898 = vcmp.eq.f32.partialorder %v897, 8.507059e+37
    %v899 = vand.u32 %v887, 2147483648
    %v900 = vor.u32 1.1754944e-38, %v899
    %v901 = vsel %vm898, %v900, %v896
    %v902 = vmul.f32 1.0, %v901
    %v903 = vtanh.pop %v883
    %v904 = vmul.f32 %v902, %v826
    %v906 = vrot.slane %v903, 2
    %v908 = vmul.f32 %v902, %v906
    %910 = vrot.lane.b32.xlu0 %v908, 64
    %v911 = vpop.permute.xlu0 %910
    %v913 = vadd.f32 %v904, %v911
    %v914 = vtanh.pop %v913
    %916 = vrot.lane.b32.xlu0 %v902, 64
    %v917 = vpop.permute.xlu0 %916
    %v918 = vrot.slane %v917, 2
    %921 = vrot.lane.b32.xlu0 %v914, 64
    %v922 = vpop.permute.xlu0 %921
    %v924 = vmul.f32 %v918, %v922
    %926 = vst [vmem:[#allocation1] ss:$4 sm:$0xff] %v924
    %v927 = vld.sshfl [vmem:[#allocation1] sm:$0xff pattern:$0x73625140]
    %928 = vrot.lane.b32.xlu0 %v927, 96
    %v929 = vpop.permute.xlu0 %928
    %s931 = scalar_lea.vmem %s6, 12
    %932 = vst.msk [vmem:[%s931] sm:$0x3] %vm409, %v929
    %v933 = vpack.c.bf16 %v924, %v924
    %v935 = vsel %vm235, %v933, 0
    %937 = vmatpush.bf16.msra.mxu0 0
    %938 = vmatpush.bf16.msra.mxu0 0
    %939 = vmatpush.bf16.msra.mxu0 0
    %940 = vmatpush.bf16.msra.mxu0 0
    %941 = vmatpush.bf16.msra.mxu0 %v225
    %942 = vmatpush.bf16.msra.mxu0 %v223
    %943 = vmatpush.bf16.msra.mxu0 %v221
    %944 = vmatpush.bf16.msra.mxu0 %v219
    %945 = vmatmul.bf16.gmra.mxu0 %v935
    %v946 = vpop.f32.mrf.mxu0
    %v947 = vadd.f32 0.0, %v946
    %v948 = vpop.f32.mrf.mxu0
    %949 = vdwg.mxu0
    %950 = vmatpush.bf16.msra.mxu0 0
    %951 = vmatpush.bf16.msra.mxu0 0
    %952 = vmatpush.bf16.msra.mxu0 0
    %953 = vmatpush.bf16.msra.mxu0 0
    %954 = vmatpush.bf16.msra.mxu0 %v226
    %955 = vmatpush.bf16.msra.mxu0 %v224
    %956 = vmatpush.bf16.msra.mxu0 %v222
    %957 = vmatpush.bf16.msra.mxu0 %v220
    %958 = vmatmul.bf16.gmra.mxu0 %v935
    %v959 = vpop.f32.mrf.mxu0
    %v960 = vadd.f32 0.0, %v959
    %v961 = vpop.f32.mrf.mxu0
    %962 = vdwg.mxu0
    %v963 = vadd.f32 %v97, %v947
    %v964 = vadd.f32 %v98, %v960
    %v965 = vxor.u32 %v963, 2147483648
    %v966 = vxor.u32 %v964, 2147483648
    %v967 = vmul.f32 %v965, 1.442695
    %v968 = vpow.pop %v967
    %v969 = vmul.f32 %v966, 1.442695
    %v970 = vpow.pop %v969
    %v971 = vadd.f32 %v968, 1.0
    %v972 = vadd.f32 %v970, 1.0
    %v973 = vrcp.pop %v971
    %v974 = vmul.f32 %v971, %v973
    %v975 = vsub.f32 1.0, %v974
    %v976 = vmul.f32 %v973, %v975
    %v977 = vadd.f32 %v973, %v976
    %vm978 = vweird.f32 %v971
    %vm979 = vweird.f32 %v973
    %vm980 = vmor %vm978, %vm979
    %v981 = vsel %vm980, %v973, %v977
    %v982 = vand.u32 2147483647, %v971
    %vm983 = vcmp.eq.f32.partialorder %v982, 8.507059e+37
    %v984 = vand.u32 %v971, 2147483648
    %v985 = vor.u32 1.1754944e-38, %v984
    %v986 = vsel %vm983, %v985, %v981
    %v987 = vmul.f32 1.0, %v986
    %v988 = vrcp.pop %v972
    %v989 = vmul.f32 %v972, %v988
    %v990 = vsub.f32 1.0, %v989
    %v991 = vmul.f32 %v988, %v990
    %v992 = vadd.f32 %v988, %v991
    %vm993 = vweird.f32 %v972
    %vm994 = vweird.f32 %v988
    %vm995 = vmor %vm993, %vm994
    %v996 = vsel %vm995, %v988, %v992
    %v997 = vand.u32 2147483647, %v972
    %vm998 = vcmp.eq.f32.partialorder %v997, 8.507059e+37
    %v999 = vand.u32 %v972, 2147483648
    %v1000 = vor.u32 1.1754944e-38, %v999
    %v1001 = vsel %vm998, %v1000, %v996
    %v1002 = vmul.f32 1.0, %v1001
    %v1003 = vtanh.pop %v964
    %v1004 = vmul.f32 %v987, %v913
    %v1005 = vmul.f32 %v987, %v1003
    %1007 = vrot.lane.b32.xlu0 %v1005, 64
    %v1008 = vpop.permute.xlu0 %1007
    %v1010 = vadd.f32 %v1004, %v1008
    %v1011 = vtanh.pop %v1010
    %v1012 = vmul.f32 %v1002, %v1011
    %1014 = vrot.lane.b32.xlu0 %v1012, 32
    %v1015 = vpop.permute.xlu0 %1014
    %s1017 = scalar_lea.vmem %s6, 14
    %1018 = vst.msk [vmem:[%s1017] sm:$0x3] %vm409, %v1015
    %v1019 = vpack.c.bf16 %v1012, %v1012
    %v1020 = vld [vmem:[%s4] sm:$0xf]
    %v1021 = vld [vmem:[%s4 + $0x4] sm:$0xf]
    %v1022 = vld [vmem:[%s4 + $0x8] sm:$0xf]
    %v1023 = vld [vmem:[%s4 + $0xc] sm:$0xf]
    %v1024 = vld [vmem:[%s5] sm:$0x1]
    %v1026 = vperm.slane %v1024, 0
    %1029 = vrot.lane.b32.xlu0 %v1019, 32
    %v1030 = vpop.permute.xlu0 %1029
    %v1035 = vunpack.c.l.b16 %v1020
    %v1036 = vunpack.c.l.b16 %v1021
    %v1037 = vunpack.c.l.b16 %v1022
    %v1038 = vunpack.c.l.b16 %v1023
    %v1039 = vpack.c.b16 %v1036, %v1035
    %v1040 = vpack.c.b16 %v1038, %v1037
    %vm1043 = vcmask 261120
    %v1045 = vsel %vm1043, %v1030, 0
    %1047 = vmatpush.bf16.msra.mxu0 0
    %1048 = vmatpush.bf16.msra.mxu0 0
    %1049 = vmatpush.bf16.msra.mxu0 0
    %1050 = vmatpush.bf16.msra.mxu0 0
    %1051 = vmatpush.bf16.msra.mxu0 0
    %1052 = vmatpush.bf16.msra.mxu0 0
    %1053 = vmatpush.bf16.msra.mxu0 %v1040
    %1054 = vmatpush.bf16.msra.mxu0 %v1039
    %1055 = vmatmul.bf16.gmra.mxu0 %v1045
    %v1056 = vpop.f32.mrf.mxu0
    %v1057 = vadd.f32 %v1026, %v1056
    %v1058 = vpop.f32.mrf.mxu0
    %1059 = vdwg.mxu0
    %1060 = vst [vmem:[#allocation8] sm:$0x3] %v1057
    // Predicated region
    $region34: #{rnn_forward.1} parent=1 // pred_check
      _
    $region35: #{rnn_forward.1} parent=1 // pred_check_branch
      %1062 = sbr.rel (0) target = $region37
    $region36: #{rnn_forward.1} parent=1 // pred_region
      _
    $region37: #{rnn_forward.1} parent=1 // pred_fallthru
      _
    // Predicated region
    $region38: #{rnn_forward.1} parent=1 // pred_check
      _
    $region39: #{rnn_forward.1} parent=1 // pred_check_branch
      %1064 = sbr.rel (0) target = $region41
    $region40: #{rnn_forward.1} parent=1 // pred_region
      %1066 = vsyncadd [#allocation5], 0
      %s1068 = sshll.u32 [#allocation8], 4
      %s1069 = int_to_ptr.vmem [resolvable:$true] %s1068
      %s1070 = sshll.u32 %s7, 4
      %s1071 = int_to_ptr.hbm [resolvable:$true] %s1070
      %1073 = dma.vmem_to_hbm [thread:$0]  %s1069, 32, %s1071, [#allocation5]
    $region41: #{rnn_forward.1} parent=1 // pred_fallthru
      _
    // Predicated region
    $region42: #{rnn_forward.1} parent=1 // pred_check
      _
    $region43: #{rnn_forward.1} parent=1 // pred_check_branch
      %1075 = sbr.rel (0) target = $region45
    $region44: #{rnn_forward.1} parent=1 // pred_region
      _
    $region45: #{rnn_forward.1} parent=1 // pred_fallthru
      _
    // Predicated region
    $region46: #{rnn_forward.1} parent=1 // pred_check
      _
    $region47: #{rnn_forward.1} parent=1 // pred_check_branch
      %1077 = sbr.rel (0) target = $region49
    $region48: #{rnn_forward.1} parent=1 // pred_region
      %1079 = dma.done [#allocation5], 32
    $region49: #{rnn_forward.1} parent=1 // pred_fallthru
      _
    %1080 = vsyncpa [#allocation4], 1
    %1081 = vsyncpa [#allocation7], 1
    %1082 = vsyncpa [#allocation5], 1

</llo_original>
